<compile_context>
chip_gen: v7x
topology: tpu7x:2x2x1
jax: 0.10.0
libtpu: 0.0.40
codegen_flags: <defaults>
</compile_context>

<pallas_src>
import numpy as np
import jax
import jax.numpy as jnp
from jax.experimental import pallas as pl
from jax.experimental.pallas import tpu as pltpu


def _decoder_kernel(emb_ref, enc_ref, h0_ref, c0_ref,
                    wx0_ref, wenc_ref, wrec_ref, b_ref, wout_ref, bout_ref,
                    out_ref, hn_ref, cn_ref,
                    xout_sc, encb_sc):
    """Grid = (T // Tc, V // TN): time-chunk axis outer (sequential), vocab-tile
    axis inner.

    emb_ref : (Tc, B, E)   this chunk's embedded tokens (compute dtype)
    enc_ref : (B, H)       encoder output (resident, f32)
    h0/c0   : (L, B, H)    initial state, read once at grid point (0, 0)
    wx0_ref : (E, 4H)      layer-0 W_ih^T, embedding rows
    wenc_ref: (H, 4H)      layer-0 W_ih^T, encoder rows (used once)
    wrec_ref: (2L-1,H,4H)  [0:L] = W_hh^T per layer; [L:] = W_ih^T for layers>=1
    b_ref   : (L, 1, 4H)   b_ih + b_hh, gate order i,f,g,o (f32)
    wout_ref: (H, TN), bout_ref: (1, TN)   output-projection tile
    out_ref : (Tc, B, TN)  logits tile for this (chunk, vocab tile)
    hn/cn   : (L, B, H)    final state; also the VMEM-resident state carry
    xout_sc : (Tc*B, H)    top-layer hidden per step (compute dtype)
    encb_sc : (B, 4H)      precomputed enc @ wenc + b[0] (f32, loop-invariant)
    """
    L, B, H = hn_ref.shape
    Tc = emb_ref.shape[0]
    t_idx = pl.program_id(0)
    v_idx = pl.program_id(1)

    # One-time init: state <- (h0, c0); hoist the loop-invariant encoder
    # contribution of layer 0 out of the per-step critical path.
    @pl.when((t_idx == 0) & (v_idx == 0))
    def _init():
        hn_ref[...] = h0_ref[...].astype(jnp.float32)
        cn_ref[...] = c0_ref[...].astype(jnp.float32)
        w_enc = wenc_ref[...]
        encb_sc[...] = (jnp.dot(enc_ref[...].astype(w_enc.dtype), w_enc,
                                preferred_element_type=jnp.float32)
                        + b_ref[0])

    # LSTM recurrence: run once per time chunk (only on the first vocab tile).
    @pl.when(v_idx == 0)
    def _lstm_chunk():
        # Hoist loop-invariant loads out of the per-step work.
        w_x0 = wx0_ref[...]
        enc_b = encb_sc[...]
        w_hh = [wrec_ref[l] for l in range(L)]
        w_ih = [None] + [wrec_ref[L + l - 1] for l in range(1, L)]
        b_l = [None] + [b_ref[l] for l in range(1, L)]

        for s in range(Tc):                            # static -> unrolled
            x = emb_ref[s]                             # (B, E) compute dtype
            for l in range(L):                         # static -> unrolled
                h_prev = hn_ref[l]                     # (B, H) f32
                c_prev = cn_ref[l]
                if l == 0:
                    gates = (jnp.dot(x.astype(w_x0.dtype), w_x0,
                                     preferred_element_type=jnp.float32)
                             + jnp.dot(h_prev.astype(w_hh[0].dtype), w_hh[0],
                                       preferred_element_type=jnp.float32)
                             + enc_b)
                else:
                    gates = (jnp.dot(x.astype(w_ih[l].dtype), w_ih[l],
                                     preferred_element_type=jnp.float32)
                             + jnp.dot(h_prev.astype(w_hh[l].dtype), w_hh[l],
                                       preferred_element_type=jnp.float32)
                             + b_l[l])
                i_g = jax.nn.sigmoid(gates[:, 0 * H:1 * H])
                f_g = jax.nn.sigmoid(gates[:, 1 * H:2 * H])
                g_g = jnp.tanh(gates[:, 2 * H:3 * H])
                o_g = jax.nn.sigmoid(gates[:, 3 * H:4 * H])
                c_new = f_g * c_prev + i_g * g_g
                h_new = o_g * jnp.tanh(c_new)
                hn_ref[l] = h_new
                cn_ref[l] = c_new
                x = h_new                              # f32 input to next layer
            xout_sc[s * B:(s + 1) * B, :] = x.astype(xout_sc.dtype)

    # Output projection for this vocab tile: all Tc steps in ONE matmul.
    w_out = wout_ref[...]
    logits = (jnp.dot(xout_sc[...], w_out, preferred_element_type=jnp.float32)
              + bout_ref[...])
    out_ref[...] = logits.reshape(out_ref.shape).astype(out_ref.dtype)


def _largest_divisor_leq(n, cap):
    for c in range(min(n, cap), 0, -1):
        if n % c == 0:
            return c
    return 1


def _choose_t_chunk(T, requested):
    if requested is not None:
        if T % requested != 0:
            raise ValueError(f"t_chunk={requested} must divide T={T}")
        return requested
    return _largest_divisor_leq(T, 8)


def _choose_v_tile(V, requested):
    if requested is not None:
        if V % requested != 0 or (requested != V and requested % 128 != 0):
            raise ValueError(f"v_tile={requested} must divide V={V} and be a "
                             "multiple of 128 (or equal to V)")
        return requested
    if V <= 2048 or V % 128 != 0:
        return V
    for t in range(2048, 127, -128):
        if V % t == 0:
            return t
    return V


def decoder_rnn_decode(params, tokens, encoder_output, state, *,
                       t_chunk=None, v_tile=None, logits_dtype=jnp.float32):
    """Multi-step (teacher-forced) decode in ONE pallas_call.

    tokens         : (T, B) int32 token ids (one row per timestep)
    encoder_output : (B, H) float32
    state          : (h_0, c_0), each (L, B, H)
    returns        : logits (T, B, V), (h_n, c_n) each (L, B, H) float32
    """
    h0, c0 = state
    L, B, H = h0.shape
    T = tokens.shape[0]
    E = params["w_x0"].shape[0]
    V = params["w_out"].shape[1]
    cdtype = params["w_out"].dtype           # compute/weight dtype (bf16 or f32)

    Tc = _choose_t_chunk(T, t_chunk)
    TN = _choose_v_tile(V, v_tile)
    n_tc = T // Tc
    n_vt = V // TN

    # Embedding gather stays as JAX glue; rows are streamed in the weight dtype.
    emb = jnp.take(params["embedding"], tokens, axis=0).astype(cdtype)  # (T,B,E)
    h0f = h0.astype(jnp.float32)
    c0f = c0.astype(jnp.float32)

    out, h_n, c_n = pl.pallas_call(
        _decoder_kernel,
        grid=(n_tc, n_vt),
        in_specs=[
            pl.BlockSpec((Tc, B, E), lambda t, j: (t, 0, 0)),          # emb (streamed per chunk)
            pl.BlockSpec((B, H), lambda t, j: (0, 0)),                 # encoder_output
            pl.BlockSpec((L, B, H), lambda t, j: (0, 0, 0)),           # h0
            pl.BlockSpec((L, B, H), lambda t, j: (0, 0, 0)),           # c0
            pl.BlockSpec((E, 4 * H), lambda t, j: (0, 0)),             # w_x0 (resident)
            pl.BlockSpec((H, 4 * H), lambda t, j: (0, 0)),             # w_enc0 (resident)
            pl.BlockSpec((2 * L - 1, H, 4 * H), lambda t, j: (0, 0, 0)),  # w_rec (resident)
            pl.BlockSpec((L, 1, 4 * H), lambda t, j: (0, 0, 0)),       # bias (resident)
            pl.BlockSpec((H, TN), lambda t, j: (0, j)),                # w_out tile (streamed over V)
            pl.BlockSpec((1, TN), lambda t, j: (0, j)),                # b_out tile
        ],
        out_specs=(
            pl.BlockSpec((Tc, B, TN), lambda t, j: (t, 0, j)),         # logits tile
            pl.BlockSpec((L, B, H), lambda t, j: (0, 0, 0)),           # h_n (state carry)
            pl.BlockSpec((L, B, H), lambda t, j: (0, 0, 0)),           # c_n (state carry)
        ),
        out_shape=(
            jax.ShapeDtypeStruct((T, B, V), logits_dtype),
            jax.ShapeDtypeStruct((L, B, H), jnp.float32),
            jax.ShapeDtypeStruct((L, B, H), jnp.float32),
        ),
        scratch_shapes=[pltpu.VMEM((Tc * B, H), cdtype),      # per-step top hidden
                        pltpu.VMEM((B, 4 * H), jnp.float32)],  # hoisted enc bias
        input_output_aliases={2: 1, 3: 2},    # h0 -> h_n, c0 -> c_n (donate for in-place)
        compiler_params=pltpu.CompilerParams(
            dimension_semantics=("arbitrary", "arbitrary"),   # recurrence: keep sequential
            vmem_limit_bytes=64 * 1024 * 1024),
    )(emb, encoder_output, h0f, c0f,
      params["w_x0"], params["w_enc0"], params["w_rec"], params["b"],
      params["w_out"], params["b_out"])

    return out, (h_n, c_n)


def decoder_rnn_forward(params, input_seq, encoder_output, last_hidden):
    """Pallas-backed equivalent of DecoderRNN.forward (single step, T == 1).

    input_seq : (B,) int32 ; encoder_output : (B, H) ; last_hidden : ((L,B,H),)*2
    returns   : output (1, B, V), (h_n, c_n) each (L, B, H)
    """
    logits, hidden = decoder_rnn_decode(
        params, input_seq[None, :], encoder_output, last_hidden)
    return logits, hidden


def init_params(key, vocab_size, embedding_size, hidden_size, num_layers,
                weight_dtype=jnp.bfloat16):
    """Deterministic init mirroring the module's __init__ distributions, in the
    split/transposed layout the kernel consumes. bf16 weights by default (MXU
    native path, half the resident VMEM); gate/cell math stays f32 in-kernel."""
    V, E, H, L = vocab_size, embedding_size, hidden_size, num_layers
    keys = jax.random.split(key, 8)

    # Embedding: xavier_uniform on (V, E)
    bound_emb = float(np.sqrt(6.0 / (V + E)))
    embedding = jax.random.uniform(keys[0], (V, E), jnp.float32,
                                   -bound_emb, bound_emb)

    # LSTM weights: PyTorch default uniform(-1/sqrt(H), 1/sqrt(H)).
    k = 1.0 / float(np.sqrt(H))
    # Layer-0 W_ih^T split: embedding rows (E,4H) and encoder rows (H,4H).
    w_x0 = jax.random.uniform(keys[1], (E, 4 * H), jnp.float32, -k, k)
    w_enc0 = jax.random.uniform(keys[2], (H, 4 * H), jnp.float32, -k, k)
    # Recurrent stack: [0:L] = W_hh^T per layer; [L:2L-1] = W_ih^T layers >= 1.
    w_rec = jax.random.uniform(keys[3], (2 * L - 1, H, 4 * H),
                               jnp.float32, -k, k)
    b_ih = jax.random.uniform(keys[4], (L, 1, 4 * H), jnp.float32, -k, k)
    b_hh = jax.random.uniform(keys[5], (L, 1, 4 * H), jnp.float32, -k, k)
    b = b_ih + b_hh

    # Output projection nn.Linear(H, V): uniform(-1/sqrt(H), 1/sqrt(H)).
    w_out = jax.random.uniform(keys[6], (H, V), jnp.float32, -k, k)
    b_out = jax.random.uniform(keys[7], (1, V), jnp.float32, -k, k)

    return {"embedding": embedding,
            "w_x0": w_x0.astype(weight_dtype),
            "w_enc0": w_enc0.astype(weight_dtype),
            "w_rec": w_rec.astype(weight_dtype),
            "b": b,
            "w_out": w_out.astype(weight_dtype),
            "b_out": b_out}


def _mm(a, w):
    """Matmul with the same casting discipline as the kernel (operands in the
    weight dtype, f32 accumulation)."""
    return jnp.dot(a.astype(w.dtype), w, preferred_element_type=jnp.float32)


def _reference_decode(params, tokens, encoder_output, state):
    """Pure-JAX reference of the same math (correctness cross-check)."""
    h, c = state
    h = h.astype(jnp.float32)
    c = c.astype(jnp.float32)
    L, B, H = h.shape
    w_rec = params["w_rec"]
    enc_bias = _mm(encoder_output, params["w_enc0"]) + params["b"][0]
    logits = []
    for t in range(tokens.shape[0]):
        x = jnp.take(params["embedding"], tokens[t], axis=0)
        new_h, new_c = [], []
        for l in range(L):
            if l == 0:
                gates = _mm(x, params["w_x0"]) + _mm(h[l], w_rec[0]) + enc_bias
            else:
                gates = (_mm(x, w_rec[L + l - 1]) + _mm(h[l], w_rec[l])
                         + params["b"][l])
            i = jax.nn.sigmoid(gates[:, 0 * H:1 * H])
            f = jax.nn.sigmoid(gates[:, 1 * H:2 * H])
            g = jnp.tanh(gates[:, 2 * H:3 * H])
            o = jax.nn.sigmoid(gates[:, 3 * H:4 * H])
            cc = f * c[l] + i * g
            hh = o * jnp.tanh(cc)
            new_h.append(hh)
            new_c.append(cc)
            x = hh
        h = jnp.stack(new_h)
        c = jnp.stack(new_c)
        logits.append(_mm(x, params["w_out"]) + params["b_out"])
    return jnp.stack(logits), (h, c)


if __name__ == "__main__":
    # Small, lane-dense config consistent with the module:
    #   batch=8, embedding_size_dec=128, hidden_size_dec=128,
    #   num_layers_dec=2, output_size (vocab) = 256, decode length T=8.
    B, E, H, L, V, T = 8, 128, 128, 2, 256, 8

    key = jax.random.PRNGKey(0)
    k_param, k_tok1, k_tokT, k_enc, k_h, k_c = jax.random.split(key, 6)

    input_seq = jax.random.randint(k_tok1, (B,), 0, V, dtype=jnp.int32)
    tokens_T = jax.random.randint(k_tokT, (T, B), 0, V, dtype=jnp.int32)
    encoder_output = jax.random.normal(k_enc, (B, H), jnp.float32)
    h0 = jax.random.normal(k_h, (L, B, H), jnp.float32)
    c0 = jax.random.normal(k_c, (L, B, H), jnp.float32)

    # ---------- f32 weights: exact-semantics check (tight tolerance) ----------
    params_f32 = init_params(k_param, V, E, H, L, weight_dtype=jnp.float32)

    # Module-equivalent single-step forward (DecoderRNN.forward).
    output, (h_n, c_n) = decoder_rnn_forward(
        params_f32, input_seq, encoder_output, (h0, c0))
    jax.block_until_ready((output, h_n, c_n))
    assert output.shape == (1, B, V)
    assert h_n.shape == (L, B, H) and c_n.shape == (L, B, H)

    ref_out, (ref_h, ref_c) = _reference_decode(
        params_f32, input_seq[None, :], encoder_output, (h0, c0))
    np.testing.assert_allclose(np.asarray(output), np.asarray(ref_out),
                               rtol=1e-4, atol=1e-4)
    np.testing.assert_allclose(np.asarray(h_n), np.asarray(ref_h),
                               rtol=1e-4, atol=1e-4)
    np.testing.assert_allclose(np.asarray(c_n), np.asarray(ref_c),
                               rtol=1e-4, atol=1e-4)

    # Multi-step decode: 2 time chunks of 4 steps, 2 vocab tiles of 128.
    logits, (h_T, c_T) = decoder_rnn_decode(
        params_f32, tokens_T, encoder_output, (h0, c0), t_chunk=4, v_tile=128)
    jax.block_until_ready((logits, h_T, c_T))
    assert logits.shape == (T, B, V)

    ref_logits, (ref_hT, ref_cT) = _reference_decode(
        params_f32, tokens_T, encoder_output, (h0, c0))
    np.testing.assert_allclose(np.asarray(logits), np.asarray(ref_logits),
                               rtol=1e-4, atol=1e-4)
    np.testing.assert_allclose(np.asarray(h_T), np.asarray(ref_hT),
                               rtol=1e-4, atol=1e-4)
    np.testing.assert_allclose(np.asarray(c_T), np.asarray(ref_cT),
                               rtol=1e-4, atol=1e-4)

    # ---------- bf16 weights (default perf config): looser tolerance ----------
    params_bf16 = init_params(k_param, V, E, H, L)      # weight_dtype=bfloat16
    logits_bf, (h_Tb, c_Tb) = decoder_rnn_decode(
        params_bf16, tokens_T, encoder_output, (h0, c0), t_chunk=4, v_tile=128)
    jax.block_until_ready((logits_bf, h_Tb, c_Tb))

    ref_lbf, (ref_hb, ref_cb) = _reference_decode(
        params_bf16, tokens_T, encoder_output, (h0, c0))
    np.testing.assert_allclose(np.asarray(logits_bf), np.asarray(ref_lbf),
                               rtol=5e-3, atol=5e-3)
    np.testing.assert_allclose(np.asarray(h_Tb), np.asarray(ref_hb),
                               rtol=5e-3, atol=5e-3)
    np.testing.assert_allclose(np.asarray(c_Tb), np.asarray(ref_cb),
                               rtol=5e-3, atol=5e-3)

    print("KERNEL_OK")
</pallas_src>

<mosaic_0001>
module attributes {stable_mosaic.version = 11 : i64} {
  func.func @_decoder_kernel(%arg0: i32, %arg1: i32, %arg2: memref<1x8x128xf32, #tpu.memory_space<vmem>>, %arg3: memref<8x128xf32, #tpu.memory_space<vmem>>, %arg4: memref<2x8x128xf32, #tpu.memory_space<vmem>>, %arg5: memref<2x8x128xf32, #tpu.memory_space<vmem>>, %arg6: memref<128x512xf32, #tpu.memory_space<vmem>>, %arg7: memref<128x512xf32, #tpu.memory_space<vmem>>, %arg8: memref<3x128x512xf32, #tpu.memory_space<vmem>>, %arg9: memref<2x1x512xf32, #tpu.memory_space<vmem>>, %arg10: memref<128x256xf32, #tpu.memory_space<vmem>>, %arg11: memref<1x256xf32, #tpu.memory_space<vmem>>, %arg12: memref<1x8x256xf32, #tpu.memory_space<vmem>>, %arg13: memref<2x8x128xf32, #tpu.memory_space<vmem>>, %arg14: memref<2x8x128xf32, #tpu.memory_space<vmem>>, %arg15: memref<8x128xf32, #tpu.memory_space<vmem>>, %arg16: memref<8x512xf32, #tpu.memory_space<vmem>>) attributes {dimension_semantics = [#tpu.dimension_semantics<arbitrary>, #tpu.dimension_semantics<arbitrary>], iteration_bounds = array<i64: 1, 1>, scalar_prefetch = 0 : i64, scratch_operands = 2 : i64, tpu.core_type = #tpu.core_type<tc>, window_params = [{transform_indices = @transform_0, window_bounds = array<i64: 1, 8, 128>}, {pipeline_mode = #tpu.pipeline_mode<synchronous>, transform_indices = @transform_1, window_bounds = array<i64: 8, 128>}, {pipeline_mode = #tpu.pipeline_mode<synchronous>, transform_indices = @transform_2, window_bounds = array<i64: 2, 8, 128>}, {pipeline_mode = #tpu.pipeline_mode<synchronous>, transform_indices = @transform_3, window_bounds = array<i64: 2, 8, 128>}, {pipeline_mode = #tpu.pipeline_mode<synchronous>, transform_indices = @transform_4, window_bounds = array<i64: 128, 512>}, {pipeline_mode = #tpu.pipeline_mode<synchronous>, transform_indices = @transform_5, window_bounds = array<i64: 128, 512>}, {pipeline_mode = #tpu.pipeline_mode<synchronous>, transform_indices = @transform_6, window_bounds = array<i64: 3, 128, 512>}, {pipeline_mode = #tpu.pipeline_mode<synchronous>, transform_indices = @transform_7, window_bounds = array<i64: 2, 1, 512>}, {transform_indices = @transform_8, window_bounds = array<i64: 128, 256>}, {transform_indices = @transform_9, window_bounds = array<i64: 1, 256>}, {transform_indices = @transform_10, window_bounds = array<i64: 1, 8, 256>}, {pipeline_mode = #tpu.pipeline_mode<synchronous>, transform_indices = @transform_11, window_bounds = array<i64: 2, 8, 128>}, {pipeline_mode = #tpu.pipeline_mode<synchronous>, transform_indices = @transform_12, window_bounds = array<i64: 2, 8, 128>}]} {
    %c0_i32 = arith.constant 0 : i32
    %0 = arith.cmpi eq, %arg0, %c0_i32 : i32
    %c0_i32_0 = arith.constant 0 : i32
    %1 = arith.cmpi eq, %arg1, %c0_i32_0 : i32
    %2 = arith.andi %0, %1 : i1
    %3 = arith.extui %2 : i1 to i32
    %c0_i32_1 = arith.constant 0 : i32
    %4 = arith.cmpi ne, %3, %c0_i32_1 : i32
    scf.if %4 {
      %c0_12 = arith.constant 0 : index
      %c0_13 = arith.constant 0 : index
      %c0_14 = arith.constant 0 : index
      %16 = vector.load %arg4[%c0_12, %c0_13, %c0_14] : memref<2x8x128xf32, #tpu.memory_space<vmem>>, vector<2x8x128xf32>
      %c0_15 = arith.constant 0 : index
      %c0_16 = arith.constant 0 : index
      %c0_17 = arith.constant 0 : index
      %17 = vector.load %arg13[%c0_15, %c0_16, %c0_17] : memref<2x8x128xf32, #tpu.memory_space<vmem>>, vector<2x8x128xf32>
      tpu.vector_store %arg13[%c0_15, %c0_16, %c0_17], %16 {strides = array<i32>} : memref<2x8x128xf32, #tpu.memory_space<vmem>>, vector<2x8x128xf32>,
      %c0_18 = arith.constant 0 : index
      %c0_19 = arith.constant 0 : index
      %c0_20 = arith.constant 0 : index
      %18 = vector.load %arg5[%c0_18, %c0_19, %c0_20] : memref<2x8x128xf32, #tpu.memory_space<vmem>>, vector<2x8x128xf32>
      %c0_21 = arith.constant 0 : index
      %c0_22 = arith.constant 0 : index
      %c0_23 = arith.constant 0 : index
      %19 = vector.load %arg14[%c0_21, %c0_22, %c0_23] : memref<2x8x128xf32, #tpu.memory_space<vmem>>, vector<2x8x128xf32>
      tpu.vector_store %arg14[%c0_21, %c0_22, %c0_23], %18 {strides = array<i32>} : memref<2x8x128xf32, #tpu.memory_space<vmem>>, vector<2x8x128xf32>,
      %c0_24 = arith.constant 0 : index
      %c0_25 = arith.constant 0 : index
      %20 = vector.load %arg7[%c0_24, %c0_25] : memref<128x512xf32, #tpu.memory_space<vmem>>, vector<128x512xf32>
      %c0_26 = arith.constant 0 : index
      %c0_27 = arith.constant 0 : index
      %21 = vector.load %arg3[%c0_26, %c0_27] : memref<8x128xf32, #tpu.memory_space<vmem>>, vector<8x128xf32>
      %cst_28 = arith.constant dense<0.000000e+00> : vector<8x512xf32>
      %22 = tpu.matmul %21, %20, %cst_28 {dimension_numbers = #tpu.dot_dimension_numbers<[1], [0], [0], [1], [0, 0, 1, 1], [], []>} : vector<8x128xf32>, vector<128x512xf32>, vector<8x512xf32> -> vector<8x512xf32>
      %c0_29 = arith.constant 0 : index
      %c0_30 = arith.constant 0 : index
      %c0_31 = arith.constant 0 : index
      %23 = vector.load %arg9[%c0_29, %c0_30, %c0_31] : memref<2x1x512xf32, #tpu.memory_space<vmem>>, vector<1x1x512xf32>
      %24 = vector.shape_cast %23 : vector<1x1x512xf32> to vector<1x512xf32>
      %25 = vector.broadcast %24 : vector<1x512xf32> to vector<8x512xf32>
      %26 = arith.addf %22, %25 : vector<8x512xf32>
      %c0_32 = arith.constant 0 : index
      %c0_33 = arith.constant 0 : index
      %27 = vector.load %arg16[%c0_32, %c0_33] : memref<8x512xf32, #tpu.memory_space<vmem>>, vector<8x512xf32>
      tpu.vector_store %arg16[%c0_32, %c0_33], %26 {strides = array<i32>} : memref<8x512xf32, #tpu.memory_space<vmem>>, vector<8x512xf32>,
    } else {
    }
    %c0_i32_2 = arith.constant 0 : i32
    %5 = arith.cmpi eq, %arg1, %c0_i32_2 : i32
    %6 = arith.extui %5 : i1 to i32
    %c0_i32_3 = arith.constant 0 : i32
    %7 = arith.cmpi ne, %6, %c0_i32_3 : i32
    scf.if %7 {
      %c0_12 = arith.constant 0 : index
      %c0_13 = arith.constant 0 : index
      %16 = vector.load %arg6[%c0_12, %c0_13] : memref<128x512xf32, #tpu.memory_space<vmem>>, vector<128x512xf32>
      %c0_14 = arith.constant 0 : index
      %c0_15 = arith.constant 0 : index
      %17 = vector.load %arg16[%c0_14, %c0_15] : memref<8x512xf32, #tpu.memory_space<vmem>>, vector<8x512xf32>
      %c0_16 = arith.constant 0 : index
      %c0_17 = arith.constant 0 : index
      %c0_18 = arith.constant 0 : index
      %18 = vector.load %arg8[%c0_16, %c0_17, %c0_18] : memref<3x128x512xf32, #tpu.memory_space<vmem>>, vector<1x128x512xf32>
      %19 = vector.shape_cast %18 : vector<1x128x512xf32> to vector<128x512xf32>
      %c1 = arith.constant 1 : index
      %c0_19 = arith.constant 0 : index
      %c0_20 = arith.constant 0 : index
      %20 = vector.load %arg8[%c1, %c0_19, %c0_20] : memref<3x128x512xf32, #tpu.memory_space<vmem>>, vector<1x128x512xf32>
      %21 = vector.shape_cast %20 : vector<1x128x512xf32> to vector<128x512xf32>
      %c2 = arith.constant 2 : index
      %c0_21 = arith.constant 0 : index
      %c0_22 = arith.constant 0 : index
      %22 = vector.load %arg8[%c2, %c0_21, %c0_22] : memref<3x128x512xf32, #tpu.memory_space<vmem>>, vector<1x128x512xf32>
      %23 = vector.shape_cast %22 : vector<1x128x512xf32> to vector<128x512xf32>
      %c1_23 = arith.constant 1 : index
      %c0_24 = arith.constant 0 : index
      %c0_25 = arith.constant 0 : index
      %24 = vector.load %arg9[%c1_23, %c0_24, %c0_25] : memref<2x1x512xf32, #tpu.memory_space<vmem>>, vector<1x1x512xf32>
      %25 = vector.shape_cast %24 : vector<1x1x512xf32> to vector<1x512xf32>
      %c0_26 = arith.constant 0 : index
      %c0_27 = arith.constant 0 : index
      %c0_28 = arith.constant 0 : index
      %26 = vector.load %arg2[%c0_26, %c0_27, %c0_28] : memref<1x8x128xf32, #tpu.memory_space<vmem>>, vector<1x8x128xf32>
      %27 = vector.shape_cast %26 : vector<1x8x128xf32> to vector<8x128xf32>
      %c0_29 = arith.constant 0 : index
      %c0_30 = arith.constant 0 : index
      %c0_31 = arith.constant 0 : index
      %28 = vector.load %arg13[%c0_29, %c0_30, %c0_31] : memref<2x8x128xf32, #tpu.memory_space<vmem>>, vector<1x8x128xf32>
      %29 = vector.shape_cast %28 : vector<1x8x128xf32> to vector<8x128xf32>
      %c0_32 = arith.constant 0 : index
      %c0_33 = arith.constant 0 : index
      %c0_34 = arith.constant 0 : index
      %30 = vector.load %arg14[%c0_32, %c0_33, %c0_34] : memref<2x8x128xf32, #tpu.memory_space<vmem>>, vector<1x8x128xf32>
      %31 = vector.shape_cast %30 : vector<1x8x128xf32> to vector<8x128xf32>
      %cst_35 = arith.constant dense<0.000000e+00> : vector<8x512xf32>
      %32 = tpu.matmul %27, %16, %cst_35 {dimension_numbers = #tpu.dot_dimension_numbers<[1], [0], [0], [1], [0, 0, 1, 1], [], []>} : vector<8x128xf32>, vector<128x512xf32>, vector<8x512xf32> -> vector<8x512xf32>
      %cst_36 = arith.constant dense<0.000000e+00> : vector<8x512xf32>
      %33 = tpu.matmul %29, %19, %cst_36 {dimension_numbers = #tpu.dot_dimension_numbers<[1], [0], [0], [1], [0, 0, 1, 1], [], []>} : vector<8x128xf32>, vector<128x512xf32>, vector<8x512xf32> -> vector<8x512xf32>
      %34 = arith.addf %32, %33 : vector<8x512xf32>
      %35 = arith.addf %34, %17 : vector<8x512xf32>
      %36 = vector.extract_strided_slice %35 {offsets = [0, 0], sizes = [8, 128], strides = [1, 1]} : vector<8x512xf32> to vector<8x128xf32>
      %37 = arith.negf %36 : vector<8x128xf32>
      %38 = math.exp %37 : vector<8x128xf32>
      %cst_37 = arith.constant 1.000000e+00 : f32
      %39 = vector.broadcast %cst_37 : f32 to vector<8x128xf32>
      %40 = arith.addf %39, %38 : vector<8x128xf32>
      %41 = arith.divf %39, %40 : vector<8x128xf32>
      %42 = vector.extract_strided_slice %35 {offsets = [0, 128], sizes = [8, 128], strides = [1, 1]} : vector<8x512xf32> to vector<8x128xf32>
      %43 = arith.negf %42 : vector<8x128xf32>
      %44 = math.exp %43 : vector<8x128xf32>
      %cst_38 = arith.constant 1.000000e+00 : f32
      %45 = vector.broadcast %cst_38 : f32 to vector<8x128xf32>
      %46 = arith.addf %45, %44 : vector<8x128xf32>
      %47 = arith.divf %45, %46 : vector<8x128xf32>
      %48 = vector.extract_strided_slice %35 {offsets = [0, 256], sizes = [8, 128], strides = [1, 1]} : vector<8x512xf32> to vector<8x128xf32>
      %49 = math.tanh %48 : vector<8x128xf32>
      %50 = vector.extract_strided_slice %35 {offsets = [0, 384], sizes = [8, 128], strides = [1, 1]} : vector<8x512xf32> to vector<8x128xf32>
      %51 = arith.negf %50 : vector<8x128xf32>
      %52 = math.exp %51 : vector<8x128xf32>
      %cst_39 = arith.constant 1.000000e+00 : f32
      %53 = vector.broadcast %cst_39 : f32 to vector<8x128xf32>
      %54 = arith.addf %53, %52 : vector<8x128xf32>
      %55 = arith.divf %53, %54 : vector<8x128xf32>
      %56 = arith.mulf %47, %31 : vector<8x128xf32>
      %57 = arith.mulf %41, %49 : vector<8x128xf32>
      %58 = arith.addf %56, %57 : vector<8x128xf32>
      %59 = math.tanh %58 : vector<8x128xf32>
      %60 = arith.mulf %55, %59 : vector<8x128xf32>
      %c0_40 = arith.constant 0 : index
      %c0_41 = arith.constant 0 : index
      %c0_42 = arith.constant 0 : index
      %61 = vector.load %arg13[%c0_40, %c0_41, %c0_42] : memref<2x8x128xf32, #tpu.memory_space<vmem>>, vector<1x8x128xf32>
      %62 = vector.shape_cast %61 : vector<1x8x128xf32> to vector<8x128xf32>
      %63 = vector.shape_cast %60 : vector<8x128xf32> to vector<1x8x128xf32>
      tpu.vector_store %arg13[%c0_40, %c0_41, %c0_42], %63 {strides = array<i32>} : memref<2x8x128xf32, #tpu.memory_space<vmem>>, vector<1x8x128xf32>,
      %c0_43 = arith.constant 0 : index
      %c0_44 = arith.constant 0 : index
      %c0_45 = arith.constant 0 : index
      %64 = vector.load %arg14[%c0_43, %c0_44, %c0_45] : memref<2x8x128xf32, #tpu.memory_space<vmem>>, vector<1x8x128xf32>
      %65 = vector.shape_cast %64 : vector<1x8x128xf32> to vector<8x128xf32>
      %66 = vector.shape_cast %58 : vector<8x128xf32> to vector<1x8x128xf32>
      tpu.vector_store %arg14[%c0_43, %c0_44, %c0_45], %66 {strides = array<i32>} : memref<2x8x128xf32, #tpu.memory_space<vmem>>, vector<1x8x128xf32>,
      %c1_46 = arith.constant 1 : index
      %c0_47 = arith.constant 0 : index
      %c0_48 = arith.constant 0 : index
      %67 = vector.load %arg13[%c1_46, %c0_47, %c0_48] : memref<2x8x128xf32, #tpu.memory_space<vmem>>, vector<1x8x128xf32>
      %68 = vector.shape_cast %67 : vector<1x8x128xf32> to vector<8x128xf32>
      %c1_49 = arith.constant 1 : index
      %c0_50 = arith.constant 0 : index
      %c0_51 = arith.constant 0 : index
      %69 = vector.load %arg14[%c1_49, %c0_50, %c0_51] : memref<2x8x128xf32, #tpu.memory_space<vmem>>, vector<1x8x128xf32>
      %70 = vector.shape_cast %69 : vector<1x8x128xf32> to vector<8x128xf32>
      %cst_52 = arith.constant dense<0.000000e+00> : vector<8x512xf32>
      %71 = tpu.matmul %60, %23, %cst_52 {dimension_numbers = #tpu.dot_dimension_numbers<[1], [0], [0], [1], [0, 0, 1, 1], [], []>} : vector<8x128xf32>, vector<128x512xf32>, vector<8x512xf32> -> vector<8x512xf32>
      %cst_53 = arith.constant dense<0.000000e+00> : vector<8x512xf32>
      %72 = tpu.matmul %68, %21, %cst_53 {dimension_numbers = #tpu.dot_dimension_numbers<[1], [0], [0], [1], [0, 0, 1, 1], [], []>} : vector<8x128xf32>, vector<128x512xf32>, vector<8x512xf32> -> vector<8x512xf32>
      %73 = arith.addf %71, %72 : vector<8x512xf32>
      %74 = vector.broadcast %25 : vector<1x512xf32> to vector<8x512xf32>
      %75 = arith.addf %73, %74 : vector<8x512xf32>
      %76 = vector.extract_strided_slice %75 {offsets = [0, 0], sizes = [8, 128], strides = [1, 1]} : vector<8x512xf32> to vector<8x128xf32>
      %77 = arith.negf %76 : vector<8x128xf32>
      %78 = math.exp %77 : vector<8x128xf32>
      %cst_54 = arith.constant 1.000000e+00 : f32
      %79 = vector.broadcast %cst_54 : f32 to vector<8x128xf32>
      %80 = arith.addf %79, %78 : vector<8x128xf32>
      %81 = arith.divf %79, %80 : vector<8x128xf32>
      %82 = vector.extract_strided_slice %75 {offsets = [0, 128], sizes = [8, 128], strides = [1, 1]} : vector<8x512xf32> to vector<8x128xf32>
      %83 = arith.negf %82 : vector<8x128xf32>
      %84 = math.exp %83 : vector<8x128xf32>
      %cst_55 = arith.constant 1.000000e+00 : f32
      %85 = vector.broadcast %cst_55 : f32 to vector<8x128xf32>
      %86 = arith.addf %85, %84 : vector<8x128xf32>
      %87 = arith.divf %85, %86 : vector<8x128xf32>
      %88 = vector.extract_strided_slice %75 {offsets = [0, 256], sizes = [8, 128], strides = [1, 1]} : vector<8x512xf32> to vector<8x128xf32>
      %89 = math.tanh %88 : vector<8x128xf32>
      %90 = vector.extract_strided_slice %75 {offsets = [0, 384], sizes = [8, 128], strides = [1, 1]} : vector<8x512xf32> to vector<8x128xf32>
      %91 = arith.negf %90 : vector<8x128xf32>
      %92 = math.exp %91 : vector<8x128xf32>
      %cst_56 = arith.constant 1.000000e+00 : f32
      %93 = vector.broadcast %cst_56 : f32 to vector<8x128xf32>
      %94 = arith.addf %93, %92 : vector<8x128xf32>
      %95 = arith.divf %93, %94 : vector<8x128xf32>
      %96 = arith.mulf %87, %70 : vector<8x128xf32>
      %97 = arith.mulf %81, %89 : vector<8x128xf32>
      %98 = arith.addf %96, %97 : vector<8x128xf32>
      %99 = math.tanh %98 : vector<8x128xf32>
      %100 = arith.mulf %95, %99 : vector<8x128xf32>
      %c1_57 = arith.constant 1 : index
      %c0_58 = arith.constant 0 : index
      %c0_59 = arith.constant 0 : index
      %101 = vector.load %arg13[%c1_57, %c0_58, %c0_59] : memref<2x8x128xf32, #tpu.memory_space<vmem>>, vector<1x8x128xf32>
      %102 = vector.shape_cast %101 : vector<1x8x128xf32> to vector<8x128xf32>
      %103 = vector.shape_cast %100 : vector<8x128xf32> to vector<1x8x128xf32>
      tpu.vector_store %arg13[%c1_57, %c0_58, %c0_59], %103 {strides = array<i32>} : memref<2x8x128xf32, #tpu.memory_space<vmem>>, vector<1x8x128xf32>,
      %c1_60 = arith.constant 1 : index
      %c0_61 = arith.constant 0 : index
      %c0_62 = arith.constant 0 : index
      %104 = vector.load %arg14[%c1_60, %c0_61, %c0_62] : memref<2x8x128xf32, #tpu.memory_space<vmem>>, vector<1x8x128xf32>
      %105 = vector.shape_cast %104 : vector<1x8x128xf32> to vector<8x128xf32>
      %106 = vector.shape_cast %98 : vector<8x128xf32> to vector<1x8x128xf32>
      tpu.vector_store %arg14[%c1_60, %c0_61, %c0_62], %106 {strides = array<i32>} : memref<2x8x128xf32, #tpu.memory_space<vmem>>, vector<1x8x128xf32>,
      %c0_63 = arith.constant 0 : index
      %c0_64 = arith.constant 0 : index
      %107 = vector.load %arg15[%c0_63, %c0_64] : memref<8x128xf32, #tpu.memory_space<vmem>>, vector<8x128xf32>
      tpu.vector_store %arg15[%c0_63, %c0_64], %100 {strides = array<i32>} : memref<8x128xf32, #tpu.memory_space<vmem>>, vector<8x128xf32>,
    } else {
    }
    %c0 = arith.constant 0 : index
    %c0_4 = arith.constant 0 : index
    %8 = vector.load %arg10[%c0, %c0_4] : memref<128x256xf32, #tpu.memory_space<vmem>>, vector<128x256xf32>
    %c0_5 = arith.constant 0 : index
    %c0_6 = arith.constant 0 : index
    %9 = vector.load %arg15[%c0_5, %c0_6] : memref<8x128xf32, #tpu.memory_space<vmem>>, vector<8x128xf32>
    %cst = arith.constant dense<0.000000e+00> : vector<8x256xf32>
    %10 = tpu.matmul %9, %8, %cst {dimension_numbers = #tpu.dot_dimension_numbers<[1], [0], [0], [1], [0, 0, 1, 1], [], []>} : vector<8x128xf32>, vector<128x256xf32>, vector<8x256xf32> -> vector<8x256xf32>
    %c0_7 = arith.constant 0 : index
    %c0_8 = arith.constant 0 : index
    %11 = vector.load %arg11[%c0_7, %c0_8] : memref<1x256xf32, #tpu.memory_space<vmem>>, vector<1x256xf32>
    %12 = vector.broadcast %11 : vector<1x256xf32> to vector<8x256xf32>
    %13 = arith.addf %10, %12 : vector<8x256xf32>
    %14 = vector.shape_cast %13 : vector<8x256xf32> to vector<1x8x256xf32>
    %c0_9 = arith.constant 0 : index
    %c0_10 = arith.constant 0 : index
    %c0_11 = arith.constant 0 : index
    %15 = vector.load %arg12[%c0_9, %c0_10, %c0_11] : memref<1x8x256xf32, #tpu.memory_space<vmem>>, vector<1x8x256xf32>
    tpu.vector_store %arg12[%c0_9, %c0_10, %c0_11], %14 {strides = array<i32>} : memref<1x8x256xf32, #tpu.memory_space<vmem>>, vector<1x8x256xf32>,
    return
  }
  func.func @transform_0(%arg0: i32, %arg1: i32) -> (i32, i32, i32) {
    %c0_i32 = arith.constant 0 : i32
    %c0_i32_0 = arith.constant 0 : i32
    %c0_i32_1 = arith.constant 0 : i32
    return %arg0, %c0_i32, %c0_i32_0 : i32, i32, i32
  }
  func.func @transform_1(%arg0: i32, %arg1: i32) -> (i32, i32) {
    %c0_i32 = arith.constant 0 : i32
    %c0_i32_0 = arith.constant 0 : i32
    %c0_i32_1 = arith.constant 0 : i32
    return %c0_i32, %c0_i32_0 : i32, i32
  }
  func.func @transform_2(%arg0: i32, %arg1: i32) -> (i32, i32, i32) {
    %c0_i32 = arith.constant 0 : i32
    %c0_i32_0 = arith.constant 0 : i32
    %c0_i32_1 = arith.constant 0 : i32
    %c0_i32_2 = arith.constant 0 : i32
    return %c0_i32, %c0_i32_0, %c0_i32_1 : i32, i32, i32
  }
  func.func @transform_3(%arg0: i32, %arg1: i32) -> (i32, i32, i32) {
    %c0_i32 = arith.constant 0 : i32
    %c0_i32_0 = arith.constant 0 : i32
    %c0_i32_1 = arith.constant 0 : i32
    %c0_i32_2 = arith.constant 0 : i32
    return %c0_i32, %c0_i32_0, %c0_i32_1 : i32, i32, i32
  }
  func.func @transform_4(%arg0: i32, %arg1: i32) -> (i32, i32) {
    %c0_i32 = arith.constant 0 : i32
    %c0_i32_0 = arith.constant 0 : i32
    %c0_i32_1 = arith.constant 0 : i32
    return %c0_i32, %c0_i32_0 : i32, i32
  }
  func.func @transform_5(%arg0: i32, %arg1: i32) -> (i32, i32) {
    %c0_i32 = arith.constant 0 : i32
    %c0_i32_0 = arith.constant 0 : i32
    %c0_i32_1 = arith.constant 0 : i32
    return %c0_i32, %c0_i32_0 : i32, i32
  }
  func.func @transform_6(%arg0: i32, %arg1: i32) -> (i32, i32, i32) {
    %c0_i32 = arith.constant 0 : i32
    %c0_i32_0 = arith.constant 0 : i32
    %c0_i32_1 = arith.constant 0 : i32
    %c0_i32_2 = arith.constant 0 : i32
    return %c0_i32, %c0_i32_0, %c0_i32_1 : i32, i32, i32
  }
  func.func @transform_7(%arg0: i32, %arg1: i32) -> (i32, i32, i32) {
    %c0_i32 = arith.constant 0 : i32
    %c0_i32_0 = arith.constant 0 : i32
    %c0_i32_1 = arith.constant 0 : i32
    %c0_i32_2 = arith.constant 0 : i32
    return %c0_i32, %c0_i32_0, %c0_i32_1 : i32, i32, i32
  }
  func.func @transform_8(%arg0: i32, %arg1: i32) -> (i32, i32) {
    %c0_i32 = arith.constant 0 : i32
    %c0_i32_0 = arith.constant 0 : i32
    return %c0_i32, %arg1 : i32, i32
  }
  func.func @transform_9(%arg0: i32, %arg1: i32) -> (i32, i32) {
    %c0_i32 = arith.constant 0 : i32
    %c0_i32_0 = arith.constant 0 : i32
    return %c0_i32, %arg1 : i32, i32
  }
  func.func @transform_10(%arg0: i32, %arg1: i32) -> (i32, i32, i32) {
    %c0_i32 = arith.constant 0 : i32
    %c0_i32_0 = arith.constant 0 : i32
    return %arg0, %c0_i32, %arg1 : i32, i32, i32
  }
  func.func @transform_11(%arg0: i32, %arg1: i32) -> (i32, i32, i32) {
    %c0_i32 = arith.constant 0 : i32
    %c0_i32_0 = arith.constant 0 : i32
    %c0_i32_1 = arith.constant 0 : i32
    %c0_i32_2 = arith.constant 0 : i32
    return %c0_i32, %c0_i32_0, %c0_i32_1 : i32, i32, i32
  }
  func.func @transform_12(%arg0: i32, %arg1: i32) -> (i32, i32, i32) {
    %c0_i32 = arith.constant 0 : i32
    %c0_i32_0 = arith.constant 0 : i32
    %c0_i32_1 = arith.constant 0 : i32
    %c0_i32_2 = arith.constant 0 : i32
    return %c0_i32, %c0_i32_0, %c0_i32_1 : i32, i32, i32
  }
}

</mosaic_0001>

<llo_original>
// kernel: tpu_custom_call.1
$region0: #{tpu_custom_call.1}
  #allocation0 [shape = 'u32[]', space=smem, size = 0x4, offset = 0x4, fixed_abs, tag = 'smem constant byte address 0x4 - core index']
  #allocation1 [shape = 'u32[144,128]{1,0:T(1,128)}', space=vmem, size = 0x12000, scoped, tag = 'internal scratch']
  #allocation2 [shape = 'f32[8,128]{1,0:T(8,128)}', space=vmem, size = 0x1000, scoped, tag = 'scratch operand']
  #allocation3 [shape = 'f32[8,512]{1,0:T(8,128)}', space=vmem, size = 0x4000, scoped, tag = 'scratch operand']
  %s0 = inlined_call_operand.hbm [shape: f32[1,8,128], index: 0, kind: input, shape index: {}]
  %s1 = inlined_call_operand.hbm [shape: f32[8,128], index: 1, kind: input, shape index: {}]
  %s2 = inlined_call_operand.hbm [shape: f32[2,8,128], index: 2, kind: input, shape index: {}, may-alias: {2,11}]
  %s3 = inlined_call_operand.hbm [shape: f32[2,8,128], index: 3, kind: input, shape index: {}, may-alias: {3,12}]
  %s4 = inlined_call_operand.hbm [shape: f32[128,512], index: 4, kind: input, shape index: {}]
  %s5 = inlined_call_operand.hbm [shape: f32[128,512], index: 5, kind: input, shape index: {}]
  %s6 = inlined_call_operand.hbm [shape: f32[3,128,512], index: 6, kind: input, shape index: {}]
  %s7 = inlined_call_operand.hbm [shape: f32[2,1,512], index: 7, kind: input, shape index: {}]
  %s8 = inlined_call_operand.hbm [shape: f32[128,256], index: 8, kind: input, shape index: {}]
  %s9 = inlined_call_operand.hbm [shape: f32[1,256], index: 9, kind: input, shape index: {}]
  %s10 = inlined_call_operand.hbm [shape: f32[1,8,256], index: 10, kind: output, shape index: {0}]
  %s11 = inlined_call_operand.hbm [shape: f32[2,8,128], index: 11, kind: output, shape index: {1}, may-alias: {2,11}]
  %s12 = inlined_call_operand.hbm [shape: f32[2,8,128], index: 12, kind: output, shape index: {2}, may-alias: {3,12}]
  %13 = xla_tuple %s10, %s11, %s12
  %s14 = sld [smem:[#allocation0]]
  $region114: #{tpu_custom_call.1} parent=0
    _
  %s16 = ssub.s32 1, %s14
  %s17 = scalar_select 0, %s16, %s14
  $region1: #{tpu_custom_call.1} parent=0
    #allocation4 [shape = 'u8[4096]{0}', space=vmem, size = 0x1000, scoped, tag = 'input window, operand 0, single buffered']
    #allocation5 [shape = 's32[1]{0}', space=sflag, size = 0x4, scoped, tag = 'scoped memory for tpu_custom_call.1']
    #allocation6 [shape = 's32[1]{0}', space=sflag, size = 0x4, scoped, tag = 'scoped memory for tpu_custom_call.1']
    #allocation7 [shape = 'u8[4096]{0}', space=vmem, size = 0x1000, scoped, tag = 'input window, operand 1, single buffered']
    #allocation8 [shape = 's32[1]{0}', space=sflag, size = 0x4, scoped, tag = 'scoped memory for tpu_custom_call.1']
    #allocation9 [shape = 'u8[8192]{0}', space=vmem, size = 0x2000, scoped, tag = 'input window, operand 2, single buffered']
    #allocation10 [shape = 'u8[8192]{0}', space=vmem, size = 0x2000, scoped, tag = 'input window, operand 3, single buffered']
    #allocation11 [shape = 's32[1]{0}', space=sflag, size = 0x4, scoped, tag = 'scoped memory for tpu_custom_call.1']
    #allocation12 [shape = 'u8[262144]{0}', space=vmem, size = 0x40000, scoped, tag = 'input window, operand 4, single buffered']
    #allocation13 [shape = 'u8[262144]{0}', space=vmem, size = 0x40000, scoped, tag = 'input window, operand 5, single buffered']
    #allocation14 [shape = 's32[1]{0}', space=sflag, size = 0x4, scoped, tag = 'scoped memory for tpu_custom_call.1']
    #allocation15 [shape = 'u8[786432]{0}', space=vmem, size = 0xc0000, scoped, tag = 'input window, operand 6, single buffered']
    #allocation16 [shape = 'u8[4096]{0}', space=vmem, size = 0x1000, scoped, tag = 'input window, operand 7, single buffered']
    #allocation17 [shape = 's32[1]{0}', space=sflag, size = 0x4, scoped, tag = 'scoped memory for tpu_custom_call.1']
    #allocation18 [shape = 'u8[131072]{0}', space=vmem, size = 0x20000, scoped, tag = 'input window, operand 8, single buffered']
    #allocation19 [shape = 'u8[1024]{0}', space=vmem, size = 0x400, scoped, tag = 'input window, operand 9, single buffered']
    #allocation20 [shape = 's32[1]{0}', space=sflag, size = 0x4, scoped, tag = 'scoped memory for tpu_custom_call.1']
    #allocation21 [shape = 'u8[8192]{0}', space=vmem, size = 0x2000, scoped, tag = 'output window, operand 0, single buffered']
    #allocation22 [shape = 'u8[8192]{0}', space=vmem, size = 0x2000, scoped, tag = 'output window, operand 1, single buffered']
    #allocation23 [shape = 's32[1]{0}', space=sflag, size = 0x4, scoped, tag = 'scoped memory for tpu_custom_call.1']
    #allocation24 [shape = 'u8[8192]{0}', space=vmem, size = 0x2000, scoped, tag = 'output window, operand 2, single buffered']
    %18 = vsyncpa [#allocation5], 0
    %19 = vsyncpa [#allocation8], 0
    %20 = vsyncpa [#allocation11], 0
    %21 = vsyncpa [#allocation14], 0
    %22 = vsyncpa [#allocation17], 0
    %23 = vsyncpa [#allocation20], 0
    %24 = vsyncpa [#allocation6], 0
    %25 = vsyncpa [#allocation23], 0
    // Predicated region
    $region2: #{tpu_custom_call.1} parent=1 // pred_check
      _
    $region3: #{tpu_custom_call.1} parent=1 // pred_check_branch
      %27 = sbr.rel (0) target = $region5
    $region4: #{tpu_custom_call.1} parent=1 // pred_region
      %s29 = ssub.s32 128, 128
      %30 = vsyncadd [#allocation5], %s29
      %s32 = sshll.u32 [#allocation4], 4
      %s33 = int_to_ptr.vmem [resolvable:$true] %s32
      %35 = dma.hbm_to_vmem [thread:$0]  %s0, 128, %s33, [#allocation5]
    $region5: #{tpu_custom_call.1} parent=1 // pred_fallthru
      _
    // Predicated region
    $region6: #{tpu_custom_call.1} parent=1 // pred_check
      _
    $region7: #{tpu_custom_call.1} parent=1 // pred_check_branch
      %37 = sbr.rel (0) target = $region9
    $region8: #{tpu_custom_call.1} parent=1 // pred_region
      %s39 = ssub.s32 128, 128
      %40 = vsyncadd [#allocation8], %s39
      %s42 = sshll.u32 [#allocation7], 4
      %s43 = int_to_ptr.vmem [resolvable:$true] %s42
      %45 = dma.hbm_to_vmem [thread:$0]  %s1, 128, %s43, [#allocation8]
    $region9: #{tpu_custom_call.1} parent=1 // pred_fallthru
      _
    // Predicated region
    $region10: #{tpu_custom_call.1} parent=1 // pred_check
      _
    $region11: #{tpu_custom_call.1} parent=1 // pred_check_branch
      %47 = sbr.rel (0) target = $region13
    $region12: #{tpu_custom_call.1} parent=1 // pred_region
      %s49 = ssub.s32 256, 256
      %50 = vsyncadd [#allocation8], %s49
      %s51 = sshll.u32 [#allocation9], 4
      %s52 = int_to_ptr.vmem [resolvable:$true] %s51
      %57 = dma.hbm_to_vmem [thread:$0]  %s2, 256, %s52, [#allocation8], 128, 128, 8
    $region13: #{tpu_custom_call.1} parent=1 // pred_fallthru
      _
    // Predicated region
    $region14: #{tpu_custom_call.1} parent=1 // pred_check
      _
    $region15: #{tpu_custom_call.1} parent=1 // pred_check_branch
      %59 = sbr.rel (0) target = $region17
    $region16: #{tpu_custom_call.1} parent=1 // pred_region
      %s61 = ssub.s32 256, 256
      %62 = vsyncadd [#allocation11], %s61
      %s63 = sshll.u32 [#allocation10], 4
      %s64 = int_to_ptr.vmem [resolvable:$true] %s63
      %69 = dma.hbm_to_vmem [thread:$0]  %s3, 256, %s64, [#allocation11], 128, 128, 8
    $region17: #{tpu_custom_call.1} parent=1 // pred_fallthru
      _
    // Predicated region
    $region18: #{tpu_custom_call.1} parent=1 // pred_check
      _
    $region19: #{tpu_custom_call.1} parent=1 // pred_check_branch
      %71 = sbr.rel (0) target = $region21
    $region20: #{tpu_custom_call.1} parent=1 // pred_region
      %s73 = ssub.s32 8192, 8192
      %74 = vsyncadd [#allocation11], %s73
      %s75 = sshll.u32 [#allocation12], 4
      %s76 = int_to_ptr.vmem [resolvable:$true] %s75
      %81 = dma.hbm_to_vmem [thread:$0]  %s4, 8192, %s76, [#allocation11], 512, 512, 32
    $region21: #{tpu_custom_call.1} parent=1 // pred_fallthru
      _
    // Predicated region
    $region22: #{tpu_custom_call.1} parent=1 // pred_check
      _
    $region23: #{tpu_custom_call.1} parent=1 // pred_check_branch
      %83 = sbr.rel (0) target = $region25
    $region24: #{tpu_custom_call.1} parent=1 // pred_region
      %s85 = ssub.s32 8192, 8192
      %86 = vsyncadd [#allocation14], %s85
      %s87 = sshll.u32 [#allocation13], 4
      %s88 = int_to_ptr.vmem [resolvable:$true] %s87
      %93 = dma.hbm_to_vmem [thread:$0]  %s5, 8192, %s88, [#allocation14], 512, 512, 32
    $region25: #{tpu_custom_call.1} parent=1 // pred_fallthru
      _
    // Predicated region
    $region26: #{tpu_custom_call.1} parent=1 // pred_check
      _
    $region27: #{tpu_custom_call.1} parent=1 // pred_check_branch
      %95 = sbr.rel (0) target = $region29
    $region28: #{tpu_custom_call.1} parent=1 // pred_region
      %s97 = ssub.s32 24576, 24576
      %98 = vsyncadd [#allocation14], %s97
      %s99 = sshll.u32 [#allocation15], 4
      %s100 = int_to_ptr.vmem [resolvable:$true] %s99
      %105 = dma.hbm_to_vmem [thread:$0]  %s6, 24576, %s100, [#allocation14], 512, 512, 32
    $region29: #{tpu_custom_call.1} parent=1 // pred_fallthru
      _
    // Predicated region
    $region30: #{tpu_custom_call.1} parent=1 // pred_check
      _
    $region31: #{tpu_custom_call.1} parent=1 // pred_check_branch
      %107 = sbr.rel (0) target = $region33
    $region32: #{tpu_custom_call.1} parent=1 // pred_region
      %s109 = ssub.s32 128, 128
      %110 = vsyncadd [#allocation17], %s109
      %s111 = sshll.u32 [#allocation16], 4
      %s112 = int_to_ptr.vmem [resolvable:$true] %s111
      %117 = dma.hbm_to_vmem [thread:$0]  %s7, 128, %s112, [#allocation17], 64, 64, 4
    $region33: #{tpu_custom_call.1} parent=1 // pred_fallthru
      _
    // Predicated region
    $region34: #{tpu_custom_call.1} parent=1 // pred_check
      _
    $region35: #{tpu_custom_call.1} parent=1 // pred_check_branch
      %119 = sbr.rel (0) target = $region37
    $region36: #{tpu_custom_call.1} parent=1 // pred_region
      %s121 = ssub.s32 4096, 4096
      %122 = vsyncadd [#allocation17], %s121
      %s123 = sshll.u32 [#allocation18], 4
      %s124 = int_to_ptr.vmem [resolvable:$true] %s123
      %129 = dma.hbm_to_vmem [thread:$0]  %s8, 4096, %s124, [#allocation17], 256, 256, 16
    $region37: #{tpu_custom_call.1} parent=1 // pred_fallthru
      _
    // Predicated region
    $region38: #{tpu_custom_call.1} parent=1 // pred_check
      _
    $region39: #{tpu_custom_call.1} parent=1 // pred_check_branch
      %131 = sbr.rel (0) target = $region41
    $region40: #{tpu_custom_call.1} parent=1 // pred_region
      %s133 = ssub.s32 32, 32
      %134 = vsyncadd [#allocation20], %s133
      %s136 = sshll.u32 [#allocation19], 4
      %s137 = int_to_ptr.vmem [resolvable:$true] %s136
      %139 = dma.hbm_to_vmem [thread:$0]  %s9, 32, %s137, [#allocation20]
    $region41: #{tpu_custom_call.1} parent=1 // pred_fallthru
      _
    // Predicated region
    $region42: #{tpu_custom_call.1} parent=1 // pred_check
      _
    $region43: #{tpu_custom_call.1} parent=1 // pred_check_branch
      %141 = sbr.rel (0) target = $region45
    $region44: #{tpu_custom_call.1} parent=1 // pred_region
      %142 = dma.done [#allocation5], 128
    $region45: #{tpu_custom_call.1} parent=1 // pred_fallthru
      _
    // Predicated region
    $region46: #{tpu_custom_call.1} parent=1 // pred_check
      _
    $region47: #{tpu_custom_call.1} parent=1 // pred_check_branch
      %144 = sbr.rel (0) target = $region49
    $region48: #{tpu_custom_call.1} parent=1 // pred_region
      %145 = dma.done [#allocation8], 128
    $region49: #{tpu_custom_call.1} parent=1 // pred_fallthru
      _
    // Predicated region
    $region50: #{tpu_custom_call.1} parent=1 // pred_check
      _
    $region51: #{tpu_custom_call.1} parent=1 // pred_check_branch
      %147 = sbr.rel (0) target = $region53
    $region52: #{tpu_custom_call.1} parent=1 // pred_region
      %148 = dma.done [#allocation8], 256
    $region53: #{tpu_custom_call.1} parent=1 // pred_fallthru
      _
    // Predicated region
    $region54: #{tpu_custom_call.1} parent=1 // pred_check
      _
    $region55: #{tpu_custom_call.1} parent=1 // pred_check_branch
      %150 = sbr.rel (0) target = $region57
    $region56: #{tpu_custom_call.1} parent=1 // pred_region
      %151 = dma.done [#allocation11], 256
    $region57: #{tpu_custom_call.1} parent=1 // pred_fallthru
      _
    // Predicated region
    $region58: #{tpu_custom_call.1} parent=1 // pred_check
      _
    $region59: #{tpu_custom_call.1} parent=1 // pred_check_branch
      %153 = sbr.rel (0) target = $region61
    $region60: #{tpu_custom_call.1} parent=1 // pred_region
      %154 = dma.done [#allocation11], 8192
    $region61: #{tpu_custom_call.1} parent=1 // pred_fallthru
      _
    // Predicated region
    $region62: #{tpu_custom_call.1} parent=1 // pred_check
      _
    $region63: #{tpu_custom_call.1} parent=1 // pred_check_branch
      %156 = sbr.rel (0) target = $region65
    $region64: #{tpu_custom_call.1} parent=1 // pred_region
      %157 = dma.done [#allocation14], 8192
    $region65: #{tpu_custom_call.1} parent=1 // pred_fallthru
      _
    // Predicated region
    $region66: #{tpu_custom_call.1} parent=1 // pred_check
      _
    $region67: #{tpu_custom_call.1} parent=1 // pred_check_branch
      %159 = sbr.rel (0) target = $region69
    $region68: #{tpu_custom_call.1} parent=1 // pred_region
      %160 = dma.done [#allocation14], 24576
    $region69: #{tpu_custom_call.1} parent=1 // pred_fallthru
      _
    // Predicated region
    $region70: #{tpu_custom_call.1} parent=1 // pred_check
      _
    $region71: #{tpu_custom_call.1} parent=1 // pred_check_branch
      %162 = sbr.rel (0) target = $region73
    $region72: #{tpu_custom_call.1} parent=1 // pred_region
      %163 = dma.done [#allocation17], 128
    $region73: #{tpu_custom_call.1} parent=1 // pred_fallthru
      _
    // Predicated region
    $region74: #{tpu_custom_call.1} parent=1 // pred_check
      _
    $region75: #{tpu_custom_call.1} parent=1 // pred_check_branch
      %165 = sbr.rel (0) target = $region77
    $region76: #{tpu_custom_call.1} parent=1 // pred_region
      %166 = dma.done [#allocation17], 4096
    $region77: #{tpu_custom_call.1} parent=1 // pred_fallthru
      _
    // Predicated region
    $region78: #{tpu_custom_call.1} parent=1 // pred_check
      _
    $region79: #{tpu_custom_call.1} parent=1 // pred_check_branch
      %168 = sbr.rel (0) target = $region81
    $region80: #{tpu_custom_call.1} parent=1 // pred_region
      %169 = dma.done [#allocation20], 32
    $region81: #{tpu_custom_call.1} parent=1 // pred_fallthru
      _
    %p170 = scmp.eq.s32.totalorder 0, 0
    %p171 = scmp.eq.s32.totalorder 0, 0
    %p172 = pnand %p170, %p171
    %p173 = pneg %p172
    // Predicated region
    $region82: #{tpu_custom_call.1} parent=1 // pred_check
      _
    $region83: #{tpu_custom_call.1} parent=1 // pred_check_branch
      %175 = sbr.rel (%p172) target = $region85
    $region84: #{tpu_custom_call.1} parent=1 // pred_region
      %v176 = vld [vmem:[#allocation9] sm:$0xff]
      %v177 = vld [vmem:[#allocation9 + $0x8] sm:$0xff]
      %178 = vst [vmem:[#allocation22] sm:$0xff] %v176
      %179 = vst [vmem:[#allocation22 + $0x8] sm:$0xff] %v177
      %v180 = vld [vmem:[#allocation10] sm:$0xff]
      %v181 = vld [vmem:[#allocation10 + $0x8] sm:$0xff]
      %182 = vst [vmem:[#allocation24] sm:$0xff] %v180
      %183 = vst [vmem:[#allocation24 + $0x8] sm:$0xff] %v181
      %v184 = vld [vmem:[#allocation13] sm:$0xff]
      %v185 = vld [vmem:[#allocation13 + $0x8] sm:$0xff]
      %v186 = vld [vmem:[#allocation13 + $0x10] sm:$0xff]
      %v187 = vld [vmem:[#allocation13 + $0x18] sm:$0xff]
      %v188 = vld [vmem:[#allocation13 + $0x20] sm:$0xff]
      %v189 = vld [vmem:[#allocation13 + $0x28] sm:$0xff]
      %v190 = vld [vmem:[#allocation13 + $0x30] sm:$0xff]
      %v191 = vld [vmem:[#allocation13 + $0x38] sm:$0xff]
      %v192 = vld [vmem:[#allocation13 + $0x40] sm:$0xff]
      %v193 = vld [vmem:[#allocation13 + $0x48] sm:$0xff]
      %v194 = vld [vmem:[#allocation13 + $0x50] sm:$0xff]
      %v195 = vld [vmem:[#allocation13 + $0x58] sm:$0xff]
      %v196 = vld [vmem:[#allocation13 + $0x60] sm:$0xff]
      %v197 = vld [vmem:[#allocation13 + $0x68] sm:$0xff]
      %v198 = vld [vmem:[#allocation13 + $0x70] sm:$0xff]
      %v199 = vld [vmem:[#allocation13 + $0x78] sm:$0xff]
      %v200 = vld [vmem:[#allocation13 + $0x80] sm:$0xff]
      %v201 = vld [vmem:[#allocation13 + $0x88] sm:$0xff]
      %v202 = vld [vmem:[#allocation13 + $0x90] sm:$0xff]
      %v203 = vld [vmem:[#allocation13 + $0x98] sm:$0xff]
      %v204 = vld [vmem:[#allocation13 + $0xa0] sm:$0xff]
      %v205 = vld [vmem:[#allocation13 + $0xa8] sm:$0xff]
      %v206 = vld [vmem:[#allocation13 + $0xb0] sm:$0xff]
      %v207 = vld [vmem:[#allocation13 + $0xb8] sm:$0xff]
      %v208 = vld [vmem:[#allocation13 + $0xc0] sm:$0xff]
      %v209 = vld [vmem:[#allocation13 + $0xc8] sm:$0xff]
      %v210 = vld [vmem:[#allocation13 + $0xd0] sm:$0xff]
      %v211 = vld [vmem:[#allocation13 + $0xd8] sm:$0xff]
      %v212 = vld [vmem:[#allocation13 + $0xe0] sm:$0xff]
      %v213 = vld [vmem:[#allocation13 + $0xe8] sm:$0xff]
      %v214 = vld [vmem:[#allocation13 + $0xf0] sm:$0xff]
      %v215 = vld [vmem:[#allocation13 + $0xf8] sm:$0xff]
      %v216 = vld [vmem:[#allocation13 + $0x100] sm:$0xff]
      %v217 = vld [vmem:[#allocation13 + $0x108] sm:$0xff]
      %v218 = vld [vmem:[#allocation13 + $0x110] sm:$0xff]
      %v219 = vld [vmem:[#allocation13 + $0x118] sm:$0xff]
      %v220 = vld [vmem:[#allocation13 + $0x120] sm:$0xff]
      %v221 = vld [vmem:[#allocation13 + $0x128] sm:$0xff]
      %v222 = vld [vmem:[#allocation13 + $0x130] sm:$0xff]
      %v223 = vld [vmem:[#allocation13 + $0x138] sm:$0xff]
      %v224 = vld [vmem:[#allocation13 + $0x140] sm:$0xff]
      %v225 = vld [vmem:[#allocation13 + $0x148] sm:$0xff]
      %v226 = vld [vmem:[#allocation13 + $0x150] sm:$0xff]
      %v227 = vld [vmem:[#allocation13 + $0x158] sm:$0xff]
      %v228 = vld [vmem:[#allocation13 + $0x160] sm:$0xff]
      %v229 = vld [vmem:[#allocation13 + $0x168] sm:$0xff]
      %v230 = vld [vmem:[#allocation13 + $0x170] sm:$0xff]
      %v231 = vld [vmem:[#allocation13 + $0x178] sm:$0xff]
      %v232 = vld [vmem:[#allocation13 + $0x180] sm:$0xff]
      %v233 = vld [vmem:[#allocation13 + $0x188] sm:$0xff]
      %v234 = vld [vmem:[#allocation13 + $0x190] sm:$0xff]
      %v235 = vld [vmem:[#allocation13 + $0x198] sm:$0xff]
      %v236 = vld [vmem:[#allocation13 + $0x1a0] sm:$0xff]
      %v237 = vld [vmem:[#allocation13 + $0x1a8] sm:$0xff]
      %v238 = vld [vmem:[#allocation13 + $0x1b0] sm:$0xff]
      %v239 = vld [vmem:[#allocation13 + $0x1b8] sm:$0xff]
      %v240 = vld [vmem:[#allocation13 + $0x1c0] sm:$0xff]
      %v241 = vld [vmem:[#allocation13 + $0x1c8] sm:$0xff]
      %v242 = vld [vmem:[#allocation13 + $0x1d0] sm:$0xff]
      %v243 = vld [vmem:[#allocation13 + $0x1d8] sm:$0xff]
      %v244 = vld [vmem:[#allocation13 + $0x1e0] sm:$0xff]
      %v245 = vld [vmem:[#allocation13 + $0x1e8] sm:$0xff]
      %v246 = vld [vmem:[#allocation13 + $0x1f0] sm:$0xff]
      %v247 = vld [vmem:[#allocation13 + $0x1f8] sm:$0xff]
      %v248 = vld [vmem:[#allocation7] sm:$0xff]
      %v249 = vld [vmem:[#allocation16] sm:$0xf]
      %v251 = vlaneseq
      %v252 = vshrl.u32 %v251, 7
      %v253 = vsub.s32 0, %v252
      %v254 = vrot.slane %v249, %v253
      %v255 = vlaneseq
      %v256 = vshrl.u32 %v255, 7
      %v257 = vsub.s32 1, %v256
      %v258 = vrot.slane %v249, %v257
      %v259 = vlaneseq
      %v260 = vshrl.u32 %v259, 7
      %v261 = vsub.s32 2, %v260
      %v262 = vrot.slane %v249, %v261
      %v263 = vlaneseq
      %v264 = vshrl.u32 %v263, 7
      %v265 = vsub.s32 3, %v264
      %v266 = vrot.slane %v249, %v265
      %271 = vmatprep.subr.mxu0 %v185
      %272 = vmatpush1.msra.mxu0 %v184
      %273 = vmatprep.subr.mxu0 %v189
      %274 = vmatpush1.msra.mxu0 %v188
      %275 = vmatprep.subr.mxu0 %v193
      %276 = vmatpush1.msra.mxu0 %v192
      %277 = vmatprep.subr.mxu0 %v197
      %278 = vmatpush1.msra.mxu0 %v196
      %279 = vmatprep.subr.mxu0 %v201
      %280 = vmatpush1.msra.mxu0 %v200
      %281 = vmatprep.subr.mxu0 %v205
      %282 = vmatpush1.msra.mxu0 %v204
      %283 = vmatprep.subr.mxu0 %v209
      %284 = vmatpush1.msra.mxu0 %v208
      %285 = vmatprep.subr.mxu0 %v213
      %286 = vmatpush1.msra.mxu0 %v212
      %287 = vmatprep.subr.mxu0 %v217
      %288 = vmatpush1.msra.mxu0 %v216
      %289 = vmatprep.subr.mxu0 %v221
      %290 = vmatpush1.msra.mxu0 %v220
      %291 = vmatprep.subr.mxu0 %v225
      %292 = vmatpush1.msra.mxu0 %v224
      %293 = vmatprep.subr.mxu0 %v229
      %294 = vmatpush1.msra.mxu0 %v228
      %295 = vmatprep.subr.mxu0 %v233
      %296 = vmatpush1.msra.mxu0 %v232
      %297 = vmatprep.subr.mxu0 %v237
      %298 = vmatpush1.msra.mxu0 %v236
      %299 = vmatprep.subr.mxu0 %v241
      %300 = vmatpush1.msra.mxu0 %v240
      %301 = vmatprep.subr.mxu0 %v245
      %302 = vmatpush1.msra.mxu0 %v244
      %303 = vmatprep.subr.mxu0 0.0
      %304 = vmatpush1.msra.mxu0 0.0
      %305 = vmatprep.subr.mxu0 0.0
      %306 = vmatpush1.msra.mxu0 0.0
      %307 = vmatprep.subr.mxu0 0.0
      %308 = vmatpush1.msra.mxu0 0.0
      %309 = vmatprep.subr.mxu0 0.0
      %310 = vmatpush1.msra.mxu0 0.0
      %311 = vmatprep.subr.mxu0 0.0
      %312 = vmatpush1.msra.mxu0 0.0
      %313 = vmatprep.subr.mxu0 0.0
      %314 = vmatpush1.msra.mxu0 0.0
      %315 = vmatprep.subr.mxu0 0.0
      %316 = vmatpush1.msra.mxu0 0.0
      %317 = vmatprep.subr.mxu0 0.0
      %318 = vmatpush1.msra.mxu0 0.0
      %319 = vmatprep.subr.mxu0 0.0
      %320 = vmatpush1.msra.mxu0 0.0
      %321 = vmatprep.subr.mxu0 0.0
      %322 = vmatpush1.msra.mxu0 0.0
      %323 = vmatprep.subr.mxu0 0.0
      %324 = vmatpush1.msra.mxu0 0.0
      %325 = vmatprep.subr.mxu0 0.0
      %326 = vmatpush1.msra.mxu0 0.0
      %327 = vmatprep.subr.mxu0 0.0
      %328 = vmatpush1.msra.mxu0 0.0
      %329 = vmatprep.subr.mxu0 0.0
      %330 = vmatpush1.msra.mxu0 0.0
      %331 = vmatprep.subr.mxu0 0.0
      %332 = vmatpush1.msra.mxu0 0.0
      %333 = vmatprep.subr.mxu0 0.0
      %334 = vmatpush1.msra.mxu0 0.0
      %335 = vmatprep.mubr.f32.mxu0 0.0
      %336 = vmatmul.mubr.f32.gmra.mrb[0].mxu0 %v248
      %v337 = vpop.f32.mrb[0].mxu0
      %v338 = vadd.f32 %v254, %v337
      %v339 = vpop.f32.mrb[0].mxu0
      %v340 = vadd.f32 %v258, %v339
      %341 = vdwg.mxu0
      %342 = vmatprep.subr.mxu0 %v187
      %343 = vmatpush1.msra.mxu0 %v186
      %344 = vmatprep.subr.mxu0 %v191
      %345 = vmatpush1.msra.mxu0 %v190
      %346 = vmatprep.subr.mxu0 %v195
      %347 = vmatpush1.msra.mxu0 %v194
      %348 = vmatprep.subr.mxu0 %v199
      %349 = vmatpush1.msra.mxu0 %v198
      %350 = vmatprep.subr.mxu0 %v203
      %351 = vmatpush1.msra.mxu0 %v202
      %352 = vmatprep.subr.mxu0 %v207
      %353 = vmatpush1.msra.mxu0 %v206
      %354 = vmatprep.subr.mxu0 %v211
      %355 = vmatpush1.msra.mxu0 %v210
      %356 = vmatprep.subr.mxu0 %v215
      %357 = vmatpush1.msra.mxu0 %v214
      %358 = vmatprep.subr.mxu0 %v219
      %359 = vmatpush1.msra.mxu0 %v218
      %360 = vmatprep.subr.mxu0 %v223
      %361 = vmatpush1.msra.mxu0 %v222
      %362 = vmatprep.subr.mxu0 %v227
      %363 = vmatpush1.msra.mxu0 %v226
      %364 = vmatprep.subr.mxu0 %v231
      %365 = vmatpush1.msra.mxu0 %v230
      %366 = vmatprep.subr.mxu0 %v235
      %367 = vmatpush1.msra.mxu0 %v234
      %368 = vmatprep.subr.mxu0 %v239
      %369 = vmatpush1.msra.mxu0 %v238
      %370 = vmatprep.subr.mxu0 %v243
      %371 = vmatpush1.msra.mxu0 %v242
      %372 = vmatprep.subr.mxu0 %v247
      %373 = vmatpush1.msra.mxu0 %v246
      %374 = vmatprep.subr.mxu0 0.0
      %375 = vmatpush1.msra.mxu0 0.0
      %376 = vmatprep.subr.mxu0 0.0
      %377 = vmatpush1.msra.mxu0 0.0
      %378 = vmatprep.subr.mxu0 0.0
      %379 = vmatpush1.msra.mxu0 0.0
      %380 = vmatprep.subr.mxu0 0.0
      %381 = vmatpush1.msra.mxu0 0.0
      %382 = vmatprep.subr.mxu0 0.0
      %383 = vmatpush1.msra.mxu0 0.0
      %384 = vmatprep.subr.mxu0 0.0
      %385 = vmatpush1.msra.mxu0 0.0
      %386 = vmatprep.subr.mxu0 0.0
      %387 = vmatpush1.msra.mxu0 0.0
      %388 = vmatprep.subr.mxu0 0.0
      %389 = vmatpush1.msra.mxu0 0.0
      %390 = vmatprep.subr.mxu0 0.0
      %391 = vmatpush1.msra.mxu0 0.0
      %392 = vmatprep.subr.mxu0 0.0
      %393 = vmatpush1.msra.mxu0 0.0
      %394 = vmatprep.subr.mxu0 0.0
      %395 = vmatpush1.msra.mxu0 0.0
      %396 = vmatprep.subr.mxu0 0.0
      %397 = vmatpush1.msra.mxu0 0.0
      %398 = vmatprep.subr.mxu0 0.0
      %399 = vmatpush1.msra.mxu0 0.0
      %400 = vmatprep.subr.mxu0 0.0
      %401 = vmatpush1.msra.mxu0 0.0
      %402 = vmatprep.subr.mxu0 0.0
      %403 = vmatpush1.msra.mxu0 0.0
      %404 = vmatprep.subr.mxu0 0.0
      %405 = vmatpush1.msra.mxu0 0.0
      %406 = vmatprep.mubr.f32.mxu0 0.0
      %407 = vmatmul.mubr.f32.gmra.mrb[0].mxu0 %v248
      %v408 = vpop.f32.mrb[0].mxu0
      %v409 = vadd.f32 %v262, %v408
      %v410 = vpop.f32.mrb[0].mxu0
      %v411 = vadd.f32 %v266, %v410
      %412 = vdwg.mxu0
      %413 = vst [vmem:[#allocation3] sm:$0xff] %v338
      %414 = vst [vmem:[#allocation3 + $0x8] sm:$0xff] %v340
      %415 = vst [vmem:[#allocation3 + $0x10] sm:$0xff] %v409
      %416 = vst [vmem:[#allocation3 + $0x18] sm:$0xff] %v411
    $region85: #{tpu_custom_call.1} parent=1 // pred_fallthru
      _
    // Predicated region
    $region86: #{tpu_custom_call.1} parent=1 // pred_check
      %p417 = pneg %p171
    $region87: #{tpu_custom_call.1} parent=1 // pred_check_branch
      %419 = sbr.rel (%p417) target = $region89
    $region88: #{tpu_custom_call.1} parent=1 // pred_region
      %v420 = vld [vmem:[#allocation12] sm:$0xff]
      %v421 = vld [vmem:[#allocation12 + $0x8] sm:$0xff]
      %v422 = vld [vmem:[#allocation12 + $0x10] sm:$0xff]
      %v423 = vld [vmem:[#allocation12 + $0x18] sm:$0xff]
      %v424 = vld [vmem:[#allocation12 + $0x20] sm:$0xff]
      %v425 = vld [vmem:[#allocation12 + $0x28] sm:$0xff]
      %v426 = vld [vmem:[#allocation12 + $0x30] sm:$0xff]
      %v427 = vld [vmem:[#allocation12 + $0x38] sm:$0xff]
      %v428 = vld [vmem:[#allocation12 + $0x40] sm:$0xff]
      %v429 = vld [vmem:[#allocation12 + $0x48] sm:$0xff]
      %v430 = vld [vmem:[#allocation12 + $0x50] sm:$0xff]
      %v431 = vld [vmem:[#allocation12 + $0x58] sm:$0xff]
      %v432 = vld [vmem:[#allocation12 + $0x60] sm:$0xff]
      %v433 = vld [vmem:[#allocation12 + $0x68] sm:$0xff]
      %v434 = vld [vmem:[#allocation12 + $0x70] sm:$0xff]
      %v435 = vld [vmem:[#allocation12 + $0x78] sm:$0xff]
      %v436 = vld [vmem:[#allocation12 + $0x80] sm:$0xff]
      %v437 = vld [vmem:[#allocation12 + $0x88] sm:$0xff]
      %v438 = vld [vmem:[#allocation12 + $0x90] sm:$0xff]
      %v439 = vld [vmem:[#allocation12 + $0x98] sm:$0xff]
      %v440 = vld [vmem:[#allocation12 + $0xa0] sm:$0xff]
      %v441 = vld [vmem:[#allocation12 + $0xa8] sm:$0xff]
      %v442 = vld [vmem:[#allocation12 + $0xb0] sm:$0xff]
      %v443 = vld [vmem:[#allocation12 + $0xb8] sm:$0xff]
      %v444 = vld [vmem:[#allocation12 + $0xc0] sm:$0xff]
      %v445 = vld [vmem:[#allocation12 + $0xc8] sm:$0xff]
      %v446 = vld [vmem:[#allocation12 + $0xd0] sm:$0xff]
      %v447 = vld [vmem:[#allocation12 + $0xd8] sm:$0xff]
      %v448 = vld [vmem:[#allocation12 + $0xe0] sm:$0xff]
      %v449 = vld [vmem:[#allocation12 + $0xe8] sm:$0xff]
      %v450 = vld [vmem:[#allocation12 + $0xf0] sm:$0xff]
      %v451 = vld [vmem:[#allocation12 + $0xf8] sm:$0xff]
      %v452 = vld [vmem:[#allocation12 + $0x100] sm:$0xff]
      %v453 = vld [vmem:[#allocation12 + $0x108] sm:$0xff]
      %v454 = vld [vmem:[#allocation12 + $0x110] sm:$0xff]
      %v455 = vld [vmem:[#allocation12 + $0x118] sm:$0xff]
      %v456 = vld [vmem:[#allocation12 + $0x120] sm:$0xff]
      %v457 = vld [vmem:[#allocation12 + $0x128] sm:$0xff]
      %v458 = vld [vmem:[#allocation12 + $0x130] sm:$0xff]
      %v459 = vld [vmem:[#allocation12 + $0x138] sm:$0xff]
      %v460 = vld [vmem:[#allocation12 + $0x140] sm:$0xff]
      %v461 = vld [vmem:[#allocation12 + $0x148] sm:$0xff]
      %v462 = vld [vmem:[#allocation12 + $0x150] sm:$0xff]
      %v463 = vld [vmem:[#allocation12 + $0x158] sm:$0xff]
      %v464 = vld [vmem:[#allocation12 + $0x160] sm:$0xff]
      %v465 = vld [vmem:[#allocation12 + $0x168] sm:$0xff]
      %v466 = vld [vmem:[#allocation12 + $0x170] sm:$0xff]
      %v467 = vld [vmem:[#allocation12 + $0x178] sm:$0xff]
      %v468 = vld [vmem:[#allocation12 + $0x180] sm:$0xff]
      %v469 = vld [vmem:[#allocation12 + $0x188] sm:$0xff]
      %v470 = vld [vmem:[#allocation12 + $0x190] sm:$0xff]
      %v471 = vld [vmem:[#allocation12 + $0x198] sm:$0xff]
      %v472 = vld [vmem:[#allocation12 + $0x1a0] sm:$0xff]
      %v473 = vld [vmem:[#allocation12 + $0x1a8] sm:$0xff]
      %v474 = vld [vmem:[#allocation12 + $0x1b0] sm:$0xff]
      %v475 = vld [vmem:[#allocation12 + $0x1b8] sm:$0xff]
      %v476 = vld [vmem:[#allocation12 + $0x1c0] sm:$0xff]
      %v477 = vld [vmem:[#allocation12 + $0x1c8] sm:$0xff]
      %v478 = vld [vmem:[#allocation12 + $0x1d0] sm:$0xff]
      %v479 = vld [vmem:[#allocation12 + $0x1d8] sm:$0xff]
      %v480 = vld [vmem:[#allocation12 + $0x1e0] sm:$0xff]
      %v481 = vld [vmem:[#allocation12 + $0x1e8] sm:$0xff]
      %v482 = vld [vmem:[#allocation12 + $0x1f0] sm:$0xff]
      %v483 = vld [vmem:[#allocation12 + $0x1f8] sm:$0xff]
      %v484 = vld [vmem:[#allocation3] sm:$0xff]
      %v485 = vld [vmem:[#allocation3 + $0x8] sm:$0xff]
      %v486 = vld [vmem:[#allocation3 + $0x10] sm:$0xff]
      %v487 = vld [vmem:[#allocation3 + $0x18] sm:$0xff]
      %v488 = vld [vmem:[#allocation15] sm:$0xff]
      %v489 = vld [vmem:[#allocation15 + $0x8] sm:$0xff]
      %v490 = vld [vmem:[#allocation15 + $0x10] sm:$0xff]
      %v491 = vld [vmem:[#allocation15 + $0x18] sm:$0xff]
      %v492 = vld [vmem:[#allocation15 + $0x20] sm:$0xff]
      %v493 = vld [vmem:[#allocation15 + $0x28] sm:$0xff]
      %v494 = vld [vmem:[#allocation15 + $0x30] sm:$0xff]
      %v495 = vld [vmem:[#allocation15 + $0x38] sm:$0xff]
      %v496 = vld [vmem:[#allocation15 + $0x40] sm:$0xff]
      %v497 = vld [vmem:[#allocation15 + $0x48] sm:$0xff]
      %v498 = vld [vmem:[#allocation15 + $0x50] sm:$0xff]
      %v499 = vld [vmem:[#allocation15 + $0x58] sm:$0xff]
      %v500 = vld [vmem:[#allocation15 + $0x60] sm:$0xff]
      %v501 = vld [vmem:[#allocation15 + $0x68] sm:$0xff]
      %v502 = vld [vmem:[#allocation15 + $0x70] sm:$0xff]
      %v503 = vld [vmem:[#allocation15 + $0x78] sm:$0xff]
      %v504 = vld [vmem:[#allocation15 + $0x80] sm:$0xff]
      %v505 = vld [vmem:[#allocation15 + $0x88] sm:$0xff]
      %v506 = vld [vmem:[#allocation15 + $0x90] sm:$0xff]
      %v507 = vld [vmem:[#allocation15 + $0x98] sm:$0xff]
      %v508 = vld [vmem:[#allocation15 + $0xa0] sm:$0xff]
      %v509 = vld [vmem:[#allocation15 + $0xa8] sm:$0xff]
      %v510 = vld [vmem:[#allocation15 + $0xb0] sm:$0xff]
      %v511 = vld [vmem:[#allocation15 + $0xb8] sm:$0xff]
      %v512 = vld [vmem:[#allocation15 + $0xc0] sm:$0xff]
      %v513 = vld [vmem:[#allocation15 + $0xc8] sm:$0xff]
      %v514 = vld [vmem:[#allocation15 + $0xd0] sm:$0xff]
      %v515 = vld [vmem:[#allocation15 + $0xd8] sm:$0xff]
      %v516 = vld [vmem:[#allocation15 + $0xe0] sm:$0xff]
      %v517 = vld [vmem:[#allocation15 + $0xe8] sm:$0xff]
      %v518 = vld [vmem:[#allocation15 + $0xf0] sm:$0xff]
      %v519 = vld [vmem:[#allocation15 + $0xf8] sm:$0xff]
      %v520 = vld [vmem:[#allocation15 + $0x100] sm:$0xff]
      %v521 = vld [vmem:[#allocation15 + $0x108] sm:$0xff]
      %v522 = vld [vmem:[#allocation15 + $0x110] sm:$0xff]
      %v523 = vld [vmem:[#allocation15 + $0x118] sm:$0xff]
      %v524 = vld [vmem:[#allocation15 + $0x120] sm:$0xff]
      %v525 = vld [vmem:[#allocation15 + $0x128] sm:$0xff]
      %v526 = vld [vmem:[#allocation15 + $0x130] sm:$0xff]
      %v527 = vld [vmem:[#allocation15 + $0x138] sm:$0xff]
      %v528 = vld [vmem:[#allocation15 + $0x140] sm:$0xff]
      %v529 = vld [vmem:[#allocation15 + $0x148] sm:$0xff]
      %v530 = vld [vmem:[#allocation15 + $0x150] sm:$0xff]
      %v531 = vld [vmem:[#allocation15 + $0x158] sm:$0xff]
      %v532 = vld [vmem:[#allocation15 + $0x160] sm:$0xff]
      %v533 = vld [vmem:[#allocation15 + $0x168] sm:$0xff]
      %v534 = vld [vmem:[#allocation15 + $0x170] sm:$0xff]
      %v535 = vld [vmem:[#allocation15 + $0x178] sm:$0xff]
      %v536 = vld [vmem:[#allocation15 + $0x180] sm:$0xff]
      %v537 = vld [vmem:[#allocation15 + $0x188] sm:$0xff]
      %v538 = vld [vmem:[#allocation15 + $0x190] sm:$0xff]
      %v539 = vld [vmem:[#allocation15 + $0x198] sm:$0xff]
      %v540 = vld [vmem:[#allocation15 + $0x1a0] sm:$0xff]
      %v541 = vld [vmem:[#allocation15 + $0x1a8] sm:$0xff]
      %v542 = vld [vmem:[#allocation15 + $0x1b0] sm:$0xff]
      %v543 = vld [vmem:[#allocation15 + $0x1b8] sm:$0xff]
      %v544 = vld [vmem:[#allocation15 + $0x1c0] sm:$0xff]
      %v545 = vld [vmem:[#allocation15 + $0x1c8] sm:$0xff]
      %v546 = vld [vmem:[#allocation15 + $0x1d0] sm:$0xff]
      %v547 = vld [vmem:[#allocation15 + $0x1d8] sm:$0xff]
      %v548 = vld [vmem:[#allocation15 + $0x1e0] sm:$0xff]
      %v549 = vld [vmem:[#allocation15 + $0x1e8] sm:$0xff]
      %v550 = vld [vmem:[#allocation15 + $0x1f0] sm:$0xff]
      %v551 = vld [vmem:[#allocation15 + $0x1f8] sm:$0xff]
      %s552 = scalar_lea.vmem [#allocation15], 512
      %v553 = vld [vmem:[%s552] sm:$0xff]
      %v554 = vld [vmem:[%s552 + $0x8] sm:$0xff]
      %v555 = vld [vmem:[%s552 + $0x10] sm:$0xff]
      %v556 = vld [vmem:[%s552 + $0x18] sm:$0xff]
      %v557 = vld [vmem:[%s552 + $0x20] sm:$0xff]
      %v558 = vld [vmem:[%s552 + $0x28] sm:$0xff]
      %v559 = vld [vmem:[%s552 + $0x30] sm:$0xff]
      %v560 = vld [vmem:[%s552 + $0x38] sm:$0xff]
      %v561 = vld [vmem:[%s552 + $0x40] sm:$0xff]
      %v562 = vld [vmem:[%s552 + $0x48] sm:$0xff]
      %v563 = vld [vmem:[%s552 + $0x50] sm:$0xff]
      %v564 = vld [vmem:[%s552 + $0x58] sm:$0xff]
      %v565 = vld [vmem:[%s552 + $0x60] sm:$0xff]
      %v566 = vld [vmem:[%s552 + $0x68] sm:$0xff]
      %v567 = vld [vmem:[%s552 + $0x70] sm:$0xff]
      %v568 = vld [vmem:[%s552 + $0x78] sm:$0xff]
      %v569 = vld [vmem:[%s552 + $0x80] sm:$0xff]
      %v570 = vld [vmem:[%s552 + $0x88] sm:$0xff]
      %v571 = vld [vmem:[%s552 + $0x90] sm:$0xff]
      %v572 = vld [vmem:[%s552 + $0x98] sm:$0xff]
      %v573 = vld [vmem:[%s552 + $0xa0] sm:$0xff]
      %v574 = vld [vmem:[%s552 + $0xa8] sm:$0xff]
      %v575 = vld [vmem:[%s552 + $0xb0] sm:$0xff]
      %v576 = vld [vmem:[%s552 + $0xb8] sm:$0xff]
      %v577 = vld [vmem:[%s552 + $0xc0] sm:$0xff]
      %v578 = vld [vmem:[%s552 + $0xc8] sm:$0xff]
      %v579 = vld [vmem:[%s552 + $0xd0] sm:$0xff]
      %v580 = vld [vmem:[%s552 + $0xd8] sm:$0xff]
      %v581 = vld [vmem:[%s552 + $0xe0] sm:$0xff]
      %v582 = vld [vmem:[%s552 + $0xe8] sm:$0xff]
      %v583 = vld [vmem:[%s552 + $0xf0] sm:$0xff]
      %v584 = vld [vmem:[%s552 + $0xf8] sm:$0xff]
      %v585 = vld [vmem:[%s552 + $0x100] sm:$0xff]
      %v586 = vld [vmem:[%s552 + $0x108] sm:$0xff]
      %v587 = vld [vmem:[%s552 + $0x110] sm:$0xff]
      %v588 = vld [vmem:[%s552 + $0x118] sm:$0xff]
      %v589 = vld [vmem:[%s552 + $0x120] sm:$0xff]
      %v590 = vld [vmem:[%s552 + $0x128] sm:$0xff]
      %v591 = vld [vmem:[%s552 + $0x130] sm:$0xff]
      %v592 = vld [vmem:[%s552 + $0x138] sm:$0xff]
      %v593 = vld [vmem:[%s552 + $0x140] sm:$0xff]
      %v594 = vld [vmem:[%s552 + $0x148] sm:$0xff]
      %v595 = vld [vmem:[%s552 + $0x150] sm:$0xff]
      %v596 = vld [vmem:[%s552 + $0x158] sm:$0xff]
      %v597 = vld [vmem:[%s552 + $0x160] sm:$0xff]
      %v598 = vld [vmem:[%s552 + $0x168] sm:$0xff]
      %v599 = vld [vmem:[%s552 + $0x170] sm:$0xff]
      %v600 = vld [vmem:[%s552 + $0x178] sm:$0xff]
      %v601 = vld [vmem:[%s552 + $0x180] sm:$0xff]
      %v602 = vld [vmem:[%s552 + $0x188] sm:$0xff]
      %v603 = vld [vmem:[%s552 + $0x190] sm:$0xff]
      %v604 = vld [vmem:[%s552 + $0x198] sm:$0xff]
      %v605 = vld [vmem:[%s552 + $0x1a0] sm:$0xff]
      %v606 = vld [vmem:[%s552 + $0x1a8] sm:$0xff]
      %v607 = vld [vmem:[%s552 + $0x1b0] sm:$0xff]
      %v608 = vld [vmem:[%s552 + $0x1b8] sm:$0xff]
      %v609 = vld [vmem:[%s552 + $0x1c0] sm:$0xff]
      %v610 = vld [vmem:[%s552 + $0x1c8] sm:$0xff]
      %v611 = vld [vmem:[%s552 + $0x1d0] sm:$0xff]
      %v612 = vld [vmem:[%s552 + $0x1d8] sm:$0xff]
      %v613 = vld [vmem:[%s552 + $0x1e0] sm:$0xff]
      %v614 = vld [vmem:[%s552 + $0x1e8] sm:$0xff]
      %v615 = vld [vmem:[%s552 + $0x1f0] sm:$0xff]
      %v616 = vld [vmem:[%s552 + $0x1f8] sm:$0xff]
      %s617 = scalar_lea.vmem [#allocation15], 1024
      %v618 = vld [vmem:[%s617] sm:$0xff]
      %v619 = vld [vmem:[%s617 + $0x8] sm:$0xff]
      %v620 = vld [vmem:[%s617 + $0x10] sm:$0xff]
      %v621 = vld [vmem:[%s617 + $0x18] sm:$0xff]
      %v622 = vld [vmem:[%s617 + $0x20] sm:$0xff]
      %v623 = vld [vmem:[%s617 + $0x28] sm:$0xff]
      %v624 = vld [vmem:[%s617 + $0x30] sm:$0xff]
      %v625 = vld [vmem:[%s617 + $0x38] sm:$0xff]
      %v626 = vld [vmem:[%s617 + $0x40] sm:$0xff]
      %v627 = vld [vmem:[%s617 + $0x48] sm:$0xff]
      %v628 = vld [vmem:[%s617 + $0x50] sm:$0xff]
      %v629 = vld [vmem:[%s617 + $0x58] sm:$0xff]
      %v630 = vld [vmem:[%s617 + $0x60] sm:$0xff]
      %v631 = vld [vmem:[%s617 + $0x68] sm:$0xff]
      %v632 = vld [vmem:[%s617 + $0x70] sm:$0xff]
      %v633 = vld [vmem:[%s617 + $0x78] sm:$0xff]
      %v634 = vld [vmem:[%s617 + $0x80] sm:$0xff]
      %v635 = vld [vmem:[%s617 + $0x88] sm:$0xff]
      %v636 = vld [vmem:[%s617 + $0x90] sm:$0xff]
      %v637 = vld [vmem:[%s617 + $0x98] sm:$0xff]
      %v638 = vld [vmem:[%s617 + $0xa0] sm:$0xff]
      %v639 = vld [vmem:[%s617 + $0xa8] sm:$0xff]
      %v640 = vld [vmem:[%s617 + $0xb0] sm:$0xff]
      %v641 = vld [vmem:[%s617 + $0xb8] sm:$0xff]
      %v642 = vld [vmem:[%s617 + $0xc0] sm:$0xff]
      %v643 = vld [vmem:[%s617 + $0xc8] sm:$0xff]
      %v644 = vld [vmem:[%s617 + $0xd0] sm:$0xff]
      %v645 = vld [vmem:[%s617 + $0xd8] sm:$0xff]
      %v646 = vld [vmem:[%s617 + $0xe0] sm:$0xff]
      %v647 = vld [vmem:[%s617 + $0xe8] sm:$0xff]
      %v648 = vld [vmem:[%s617 + $0xf0] sm:$0xff]
      %v649 = vld [vmem:[%s617 + $0xf8] sm:$0xff]
      %v650 = vld [vmem:[%s617 + $0x100] sm:$0xff]
      %v651 = vld [vmem:[%s617 + $0x108] sm:$0xff]
      %v652 = vld [vmem:[%s617 + $0x110] sm:$0xff]
      %v653 = vld [vmem:[%s617 + $0x118] sm:$0xff]
      %v654 = vld [vmem:[%s617 + $0x120] sm:$0xff]
      %v655 = vld [vmem:[%s617 + $0x128] sm:$0xff]
      %v656 = vld [vmem:[%s617 + $0x130] sm:$0xff]
      %v657 = vld [vmem:[%s617 + $0x138] sm:$0xff]
      %v658 = vld [vmem:[%s617 + $0x140] sm:$0xff]
      %v659 = vld [vmem:[%s617 + $0x148] sm:$0xff]
      %v660 = vld [vmem:[%s617 + $0x150] sm:$0xff]
      %v661 = vld [vmem:[%s617 + $0x158] sm:$0xff]
      %v662 = vld [vmem:[%s617 + $0x160] sm:$0xff]
      %v663 = vld [vmem:[%s617 + $0x168] sm:$0xff]
      %v664 = vld [vmem:[%s617 + $0x170] sm:$0xff]
      %v665 = vld [vmem:[%s617 + $0x178] sm:$0xff]
      %v666 = vld [vmem:[%s617 + $0x180] sm:$0xff]
      %v667 = vld [vmem:[%s617 + $0x188] sm:$0xff]
      %v668 = vld [vmem:[%s617 + $0x190] sm:$0xff]
      %v669 = vld [vmem:[%s617 + $0x198] sm:$0xff]
      %v670 = vld [vmem:[%s617 + $0x1a0] sm:$0xff]
      %v671 = vld [vmem:[%s617 + $0x1a8] sm:$0xff]
      %v672 = vld [vmem:[%s617 + $0x1b0] sm:$0xff]
      %v673 = vld [vmem:[%s617 + $0x1b8] sm:$0xff]
      %v674 = vld [vmem:[%s617 + $0x1c0] sm:$0xff]
      %v675 = vld [vmem:[%s617 + $0x1c8] sm:$0xff]
      %v676 = vld [vmem:[%s617 + $0x1d0] sm:$0xff]
      %v677 = vld [vmem:[%s617 + $0x1d8] sm:$0xff]
      %v678 = vld [vmem:[%s617 + $0x1e0] sm:$0xff]
      %v679 = vld [vmem:[%s617 + $0x1e8] sm:$0xff]
      %v680 = vld [vmem:[%s617 + $0x1f0] sm:$0xff]
      %v681 = vld [vmem:[%s617 + $0x1f8] sm:$0xff]
      %s682 = scalar_lea.vmem [#allocation16], 4
      %v683 = vld [vmem:[%s682] sm:$0xf]
      %v684 = vld [vmem:[#allocation4] sm:$0xff]
      %v685 = vld [vmem:[#allocation22] sm:$0xff]
      %v686 = vld [vmem:[#allocation24] sm:$0xff]
      %687 = vmatprep.subr.mxu0 %v489
      %688 = vmatpush1.msra.mxu0 %v488
      %689 = vmatprep.subr.mxu0 %v493
      %690 = vmatpush1.msra.mxu0 %v492
      %691 = vmatprep.subr.mxu0 %v497
      %692 = vmatpush1.msra.mxu0 %v496
      %693 = vmatprep.subr.mxu0 %v501
      %694 = vmatpush1.msra.mxu0 %v500
      %695 = vmatprep.subr.mxu0 %v505
      %696 = vmatpush1.msra.mxu0 %v504
      %697 = vmatprep.subr.mxu0 %v509
      %698 = vmatpush1.msra.mxu0 %v508
      %699 = vmatprep.subr.mxu0 %v513
      %700 = vmatpush1.msra.mxu0 %v512
      %701 = vmatprep.subr.mxu0 %v517
      %702 = vmatpush1.msra.mxu0 %v516
      %703 = vmatprep.subr.mxu0 %v521
      %704 = vmatpush1.msra.mxu0 %v520
      %705 = vmatprep.subr.mxu0 %v525
      %706 = vmatpush1.msra.mxu0 %v524
      %707 = vmatprep.subr.mxu0 %v529
      %708 = vmatpush1.msra.mxu0 %v528
      %709 = vmatprep.subr.mxu0 %v533
      %710 = vmatpush1.msra.mxu0 %v532
      %711 = vmatprep.subr.mxu0 %v537
      %712 = vmatpush1.msra.mxu0 %v536
      %713 = vmatprep.subr.mxu0 %v541
      %714 = vmatpush1.msra.mxu0 %v540
      %715 = vmatprep.subr.mxu0 %v545
      %716 = vmatpush1.msra.mxu0 %v544
      %717 = vmatprep.subr.mxu0 %v549
      %718 = vmatpush1.msra.mxu0 %v548
      %719 = vmatprep.subr.mxu0 0.0
      %720 = vmatpush1.msra.mxu0 0.0
      %721 = vmatprep.subr.mxu0 0.0
      %722 = vmatpush1.msra.mxu0 0.0
      %723 = vmatprep.subr.mxu0 0.0
      %724 = vmatpush1.msra.mxu0 0.0
      %725 = vmatprep.subr.mxu0 0.0
      %726 = vmatpush1.msra.mxu0 0.0
      %727 = vmatprep.subr.mxu0 0.0
      %728 = vmatpush1.msra.mxu0 0.0
      %729 = vmatprep.subr.mxu0 0.0
      %730 = vmatpush1.msra.mxu0 0.0
      %731 = vmatprep.subr.mxu0 0.0
      %732 = vmatpush1.msra.mxu0 0.0
      %733 = vmatprep.subr.mxu0 0.0
      %734 = vmatpush1.msra.mxu0 0.0
      %735 = vmatprep.subr.mxu0 0.0
      %736 = vmatpush1.msra.mxu0 0.0
      %737 = vmatprep.subr.mxu0 0.0
      %738 = vmatpush1.msra.mxu0 0.0
      %739 = vmatprep.subr.mxu0 0.0
      %740 = vmatpush1.msra.mxu0 0.0
      %741 = vmatprep.subr.mxu0 0.0
      %742 = vmatpush1.msra.mxu0 0.0
      %743 = vmatprep.subr.mxu0 0.0
      %744 = vmatpush1.msra.mxu0 0.0
      %745 = vmatprep.subr.mxu0 0.0
      %746 = vmatpush1.msra.mxu0 0.0
      %747 = vmatprep.subr.mxu0 0.0
      %748 = vmatpush1.msra.mxu0 0.0
      %749 = vmatprep.subr.mxu0 0.0
      %750 = vmatpush1.msra.mxu0 0.0
      %751 = vmatprep.mubr.f32.mxu0 0.0
      %752 = vmatmul.mubr.f32.gmra.mrb[0].mxu0 %v685
      %v753 = vpop.f32.mrb[0].mxu0
      %v754 = vadd.f32 0.0, %v753
      %v755 = vpop.f32.mrb[0].mxu0
      %v756 = vadd.f32 0.0, %v755
      %757 = vdwg.mxu0
      %758 = vmatprep.subr.mxu0 %v491
      %759 = vmatpush1.msra.mxu0 %v490
      %760 = vmatprep.subr.mxu0 %v495
      %761 = vmatpush1.msra.mxu0 %v494
      %762 = vmatprep.subr.mxu0 %v499
      %763 = vmatpush1.msra.mxu0 %v498
      %764 = vmatprep.subr.mxu0 %v503
      %765 = vmatpush1.msra.mxu0 %v502
      %766 = vmatprep.subr.mxu0 %v507
      %767 = vmatpush1.msra.mxu0 %v506
      %768 = vmatprep.subr.mxu0 %v511
      %769 = vmatpush1.msra.mxu0 %v510
      %770 = vmatprep.subr.mxu0 %v515
      %771 = vmatpush1.msra.mxu0 %v514
      %772 = vmatprep.subr.mxu0 %v519
      %773 = vmatpush1.msra.mxu0 %v518
      %774 = vmatprep.subr.mxu0 %v523
      %775 = vmatpush1.msra.mxu0 %v522
      %776 = vmatprep.subr.mxu0 %v527
      %777 = vmatpush1.msra.mxu0 %v526
      %778 = vmatprep.subr.mxu0 %v531
      %779 = vmatpush1.msra.mxu0 %v530
      %780 = vmatprep.subr.mxu0 %v535
      %781 = vmatpush1.msra.mxu0 %v534
      %782 = vmatprep.subr.mxu0 %v539
      %783 = vmatpush1.msra.mxu0 %v538
      %784 = vmatprep.subr.mxu0 %v543
      %785 = vmatpush1.msra.mxu0 %v542
      %786 = vmatprep.subr.mxu0 %v547
      %787 = vmatpush1.msra.mxu0 %v546
      %788 = vmatprep.subr.mxu0 %v551
      %789 = vmatpush1.msra.mxu0 %v550
      %790 = vmatprep.subr.mxu0 0.0
      %791 = vmatpush1.msra.mxu0 0.0
      %792 = vmatprep.subr.mxu0 0.0
      %793 = vmatpush1.msra.mxu0 0.0
      %794 = vmatprep.subr.mxu0 0.0
      %795 = vmatpush1.msra.mxu0 0.0
      %796 = vmatprep.subr.mxu0 0.0
      %797 = vmatpush1.msra.mxu0 0.0
      %798 = vmatprep.subr.mxu0 0.0
      %799 = vmatpush1.msra.mxu0 0.0
      %800 = vmatprep.subr.mxu0 0.0
      %801 = vmatpush1.msra.mxu0 0.0
      %802 = vmatprep.subr.mxu0 0.0
      %803 = vmatpush1.msra.mxu0 0.0
      %804 = vmatprep.subr.mxu0 0.0
      %805 = vmatpush1.msra.mxu0 0.0
      %806 = vmatprep.subr.mxu0 0.0
      %807 = vmatpush1.msra.mxu0 0.0
      %808 = vmatprep.subr.mxu0 0.0
      %809 = vmatpush1.msra.mxu0 0.0
      %810 = vmatprep.subr.mxu0 0.0
      %811 = vmatpush1.msra.mxu0 0.0
      %812 = vmatprep.subr.mxu0 0.0
      %813 = vmatpush1.msra.mxu0 0.0
      %814 = vmatprep.subr.mxu0 0.0
      %815 = vmatpush1.msra.mxu0 0.0
      %816 = vmatprep.subr.mxu0 0.0
      %817 = vmatpush1.msra.mxu0 0.0
      %818 = vmatprep.subr.mxu0 0.0
      %819 = vmatpush1.msra.mxu0 0.0
      %820 = vmatprep.subr.mxu0 0.0
      %821 = vmatpush1.msra.mxu0 0.0
      %822 = vmatprep.mubr.f32.mxu0 0.0
      %823 = vmatmul.mubr.f32.gmra.mrb[0].mxu0 %v685
      %v824 = vpop.f32.mrb[0].mxu0
      %v825 = vadd.f32 0.0, %v824
      %v826 = vpop.f32.mrb[0].mxu0
      %v827 = vadd.f32 0.0, %v826
      %828 = vdwg.mxu0
      %829 = vmatprep.subr.mxu0 %v421
      %830 = vmatpush1.msra.mxu0 %v420
      %831 = vmatprep.subr.mxu0 %v425
      %832 = vmatpush1.msra.mxu0 %v424
      %833 = vmatprep.subr.mxu0 %v429
      %834 = vmatpush1.msra.mxu0 %v428
      %835 = vmatprep.subr.mxu0 %v433
      %836 = vmatpush1.msra.mxu0 %v432
      %837 = vmatprep.subr.mxu0 %v437
      %838 = vmatpush1.msra.mxu0 %v436
      %839 = vmatprep.subr.mxu0 %v441
      %840 = vmatpush1.msra.mxu0 %v440
      %841 = vmatprep.subr.mxu0 %v445
      %842 = vmatpush1.msra.mxu0 %v444
      %843 = vmatprep.subr.mxu0 %v449
      %844 = vmatpush1.msra.mxu0 %v448
      %845 = vmatprep.subr.mxu0 %v453
      %846 = vmatpush1.msra.mxu0 %v452
      %847 = vmatprep.subr.mxu0 %v457
      %848 = vmatpush1.msra.mxu0 %v456
      %849 = vmatprep.subr.mxu0 %v461
      %850 = vmatpush1.msra.mxu0 %v460
      %851 = vmatprep.subr.mxu0 %v465
      %852 = vmatpush1.msra.mxu0 %v464
      %853 = vmatprep.subr.mxu0 %v469
      %854 = vmatpush1.msra.mxu0 %v468
      %855 = vmatprep.subr.mxu0 %v473
      %856 = vmatpush1.msra.mxu0 %v472
      %857 = vmatprep.subr.mxu0 %v477
      %858 = vmatpush1.msra.mxu0 %v476
      %859 = vmatprep.subr.mxu0 %v481
      %860 = vmatpush1.msra.mxu0 %v480
      %861 = vmatprep.subr.mxu0 0.0
      %862 = vmatpush1.msra.mxu0 0.0
      %863 = vmatprep.subr.mxu0 0.0
      %864 = vmatpush1.msra.mxu0 0.0
      %865 = vmatprep.subr.mxu0 0.0
      %866 = vmatpush1.msra.mxu0 0.0
      %867 = vmatprep.subr.mxu0 0.0
      %868 = vmatpush1.msra.mxu0 0.0
      %869 = vmatprep.subr.mxu0 0.0
      %870 = vmatpush1.msra.mxu0 0.0
      %871 = vmatprep.subr.mxu0 0.0
      %872 = vmatpush1.msra.mxu0 0.0
      %873 = vmatprep.subr.mxu0 0.0
      %874 = vmatpush1.msra.mxu0 0.0
      %875 = vmatprep.subr.mxu0 0.0
      %876 = vmatpush1.msra.mxu0 0.0
      %877 = vmatprep.subr.mxu0 0.0
      %878 = vmatpush1.msra.mxu0 0.0
      %879 = vmatprep.subr.mxu0 0.0
      %880 = vmatpush1.msra.mxu0 0.0
      %881 = vmatprep.subr.mxu0 0.0
      %882 = vmatpush1.msra.mxu0 0.0
      %883 = vmatprep.subr.mxu0 0.0
      %884 = vmatpush1.msra.mxu0 0.0
      %885 = vmatprep.subr.mxu0 0.0
      %886 = vmatpush1.msra.mxu0 0.0
      %887 = vmatprep.subr.mxu0 0.0
      %888 = vmatpush1.msra.mxu0 0.0
      %889 = vmatprep.subr.mxu0 0.0
      %890 = vmatpush1.msra.mxu0 0.0
      %891 = vmatprep.subr.mxu0 0.0
      %892 = vmatpush1.msra.mxu0 0.0
      %893 = vmatprep.mubr.f32.mxu0 0.0
      %894 = vmatmul.mubr.f32.gmra.mrb[0].mxu0 %v684
      %v895 = vpop.f32.mrb[0].mxu0
      %v896 = vadd.f32 %v754, %v895
      %v897 = vpop.f32.mrb[0].mxu0
      %v898 = vadd.f32 %v756, %v897
      %899 = vdwg.mxu0
      %900 = vmatprep.subr.mxu0 %v423
      %901 = vmatpush1.msra.mxu0 %v422
      %902 = vmatprep.subr.mxu0 %v427
      %903 = vmatpush1.msra.mxu0 %v426
      %904 = vmatprep.subr.mxu0 %v431
      %905 = vmatpush1.msra.mxu0 %v430
      %906 = vmatprep.subr.mxu0 %v435
      %907 = vmatpush1.msra.mxu0 %v434
      %908 = vmatprep.subr.mxu0 %v439
      %909 = vmatpush1.msra.mxu0 %v438
      %910 = vmatprep.subr.mxu0 %v443
      %911 = vmatpush1.msra.mxu0 %v442
      %912 = vmatprep.subr.mxu0 %v447
      %913 = vmatpush1.msra.mxu0 %v446
      %914 = vmatprep.subr.mxu0 %v451
      %915 = vmatpush1.msra.mxu0 %v450
      %916 = vmatprep.subr.mxu0 %v455
      %917 = vmatpush1.msra.mxu0 %v454
      %918 = vmatprep.subr.mxu0 %v459
      %919 = vmatpush1.msra.mxu0 %v458
      %920 = vmatprep.subr.mxu0 %v463
      %921 = vmatpush1.msra.mxu0 %v462
      %922 = vmatprep.subr.mxu0 %v467
      %923 = vmatpush1.msra.mxu0 %v466
      %924 = vmatprep.subr.mxu0 %v471
      %925 = vmatpush1.msra.mxu0 %v470
      %926 = vmatprep.subr.mxu0 %v475
      %927 = vmatpush1.msra.mxu0 %v474
      %928 = vmatprep.subr.mxu0 %v479
      %929 = vmatpush1.msra.mxu0 %v478
      %930 = vmatprep.subr.mxu0 %v483
      %931 = vmatpush1.msra.mxu0 %v482
      %932 = vmatprep.subr.mxu0 0.0
      %933 = vmatpush1.msra.mxu0 0.0
      %934 = vmatprep.subr.mxu0 0.0
      %935 = vmatpush1.msra.mxu0 0.0
      %936 = vmatprep.subr.mxu0 0.0
      %937 = vmatpush1.msra.mxu0 0.0
      %938 = vmatprep.subr.mxu0 0.0
      %939 = vmatpush1.msra.mxu0 0.0
      %940 = vmatprep.subr.mxu0 0.0
      %941 = vmatpush1.msra.mxu0 0.0
      %942 = vmatprep.subr.mxu0 0.0
      %943 = vmatpush1.msra.mxu0 0.0
      %944 = vmatprep.subr.mxu0 0.0
      %945 = vmatpush1.msra.mxu0 0.0
      %946 = vmatprep.subr.mxu0 0.0
      %947 = vmatpush1.msra.mxu0 0.0
      %948 = vmatprep.subr.mxu0 0.0
      %949 = vmatpush1.msra.mxu0 0.0
      %950 = vmatprep.subr.mxu0 0.0
      %951 = vmatpush1.msra.mxu0 0.0
      %952 = vmatprep.subr.mxu0 0.0
      %953 = vmatpush1.msra.mxu0 0.0
      %954 = vmatprep.subr.mxu0 0.0
      %955 = vmatpush1.msra.mxu0 0.0
      %956 = vmatprep.subr.mxu0 0.0
      %957 = vmatpush1.msra.mxu0 0.0
      %958 = vmatprep.subr.mxu0 0.0
      %959 = vmatpush1.msra.mxu0 0.0
      %960 = vmatprep.subr.mxu0 0.0
      %961 = vmatpush1.msra.mxu0 0.0
      %962 = vmatprep.subr.mxu0 0.0
      %963 = vmatpush1.msra.mxu0 0.0
      %964 = vmatprep.mubr.f32.mxu0 0.0
      %965 = vmatmul.mubr.f32.gmra.mrb[0].mxu0 %v684
      %v966 = vpop.f32.mrb[0].mxu0
      %v967 = vadd.f32 %v825, %v966
      %v968 = vpop.f32.mrb[0].mxu0
      %v969 = vadd.f32 %v827, %v968
      %970 = vdwg.mxu0
      %v971 = vadd.f32 %v896, %v484
      %v972 = vadd.f32 %v898, %v485
      %v973 = vadd.f32 %v967, %v486
      %v974 = vadd.f32 %v969, %v487
      %v975 = vxor.u32 %v971, 2147483648
      %v976 = vmul.f32 %v975, 1.442695
      %v977 = vpow.pop %v976
      %v978 = vadd.f32 %v977, 1.0
      %v979 = vrcp.pop %v978
      %v980 = vmul.f32 1.0, %v979
      %v981 = vxor.u32 %v972, 2147483648
      %v982 = vmul.f32 %v981, 1.442695
      %v983 = vpow.pop %v982
      %v984 = vadd.f32 %v983, 1.0
      %v985 = vrcp.pop %v984
      %v986 = vmul.f32 1.0, %v985
      %v987 = vtanh.pop %v973
      %v988 = vxor.u32 %v974, 2147483648
      %v989 = vmul.f32 %v988, 1.442695
      %v990 = vpow.pop %v989
      %v991 = vadd.f32 %v990, 1.0
      %v992 = vrcp.pop %v991
      %v993 = vmul.f32 1.0, %v992
      %v994 = vmul.f32 %v986, %v686
      %v995 = vmul.f32 %v980, %v987
      %v996 = vadd.f32 %v994, %v995
      %v997 = vtanh.pop %v996
      %v998 = vmul.f32 %v993, %v997
      %999 = vst [vmem:[#allocation22] sm:$0xff] %v998
      %1000 = vst [vmem:[#allocation24] sm:$0xff] %v996
      %s1001 = scalar_lea.vmem [#allocation22], 8
      %v1002 = vld [vmem:[%s1001] sm:$0xff]
      %s1003 = scalar_lea.vmem [#allocation24], 8
      %v1004 = vld [vmem:[%s1003] sm:$0xff]
      %1005 = vmatprep.subr.mxu0 %v554
      %1006 = vmatpush1.msra.mxu0 %v553
      %1007 = vmatprep.subr.mxu0 %v558
      %1008 = vmatpush1.msra.mxu0 %v557
      %1009 = vmatprep.subr.mxu0 %v562
      %1010 = vmatpush1.msra.mxu0 %v561
      %1011 = vmatprep.subr.mxu0 %v566
      %1012 = vmatpush1.msra.mxu0 %v565
      %1013 = vmatprep.subr.mxu0 %v570
      %1014 = vmatpush1.msra.mxu0 %v569
      %1015 = vmatprep.subr.mxu0 %v574
      %1016 = vmatpush1.msra.mxu0 %v573
      %1017 = vmatprep.subr.mxu0 %v578
      %1018 = vmatpush1.msra.mxu0 %v577
      %1019 = vmatprep.subr.mxu0 %v582
      %1020 = vmatpush1.msra.mxu0 %v581
      %1021 = vmatprep.subr.mxu0 %v586
      %1022 = vmatpush1.msra.mxu0 %v585
      %1023 = vmatprep.subr.mxu0 %v590
      %1024 = vmatpush1.msra.mxu0 %v589
      %1025 = vmatprep.subr.mxu0 %v594
      %1026 = vmatpush1.msra.mxu0 %v593
      %1027 = vmatprep.subr.mxu0 %v598
      %1028 = vmatpush1.msra.mxu0 %v597
      %1029 = vmatprep.subr.mxu0 %v602
      %1030 = vmatpush1.msra.mxu0 %v601
      %1031 = vmatprep.subr.mxu0 %v606
      %1032 = vmatpush1.msra.mxu0 %v605
      %1033 = vmatprep.subr.mxu0 %v610
      %1034 = vmatpush1.msra.mxu0 %v609
      %1035 = vmatprep.subr.mxu0 %v614
      %1036 = vmatpush1.msra.mxu0 %v613
      %1037 = vmatprep.subr.mxu0 0.0
      %1038 = vmatpush1.msra.mxu0 0.0
      %1039 = vmatprep.subr.mxu0 0.0
      %1040 = vmatpush1.msra.mxu0 0.0
      %1041 = vmatprep.subr.mxu0 0.0
      %1042 = vmatpush1.msra.mxu0 0.0
      %1043 = vmatprep.subr.mxu0 0.0
      %1044 = vmatpush1.msra.mxu0 0.0
      %1045 = vmatprep.subr.mxu0 0.0
      %1046 = vmatpush1.msra.mxu0 0.0
      %1047 = vmatprep.subr.mxu0 0.0
      %1048 = vmatpush1.msra.mxu0 0.0
      %1049 = vmatprep.subr.mxu0 0.0
      %1050 = vmatpush1.msra.mxu0 0.0
      %1051 = vmatprep.subr.mxu0 0.0
      %1052 = vmatpush1.msra.mxu0 0.0
      %1053 = vmatprep.subr.mxu0 0.0
      %1054 = vmatpush1.msra.mxu0 0.0
      %1055 = vmatprep.subr.mxu0 0.0
      %1056 = vmatpush1.msra.mxu0 0.0
      %1057 = vmatprep.subr.mxu0 0.0
      %1058 = vmatpush1.msra.mxu0 0.0
      %1059 = vmatprep.subr.mxu0 0.0
      %1060 = vmatpush1.msra.mxu0 0.0
      %1061 = vmatprep.subr.mxu0 0.0
      %1062 = vmatpush1.msra.mxu0 0.0
      %1063 = vmatprep.subr.mxu0 0.0
      %1064 = vmatpush1.msra.mxu0 0.0
      %1065 = vmatprep.subr.mxu0 0.0
      %1066 = vmatpush1.msra.mxu0 0.0
      %1067 = vmatprep.subr.mxu0 0.0
      %1068 = vmatpush1.msra.mxu0 0.0
      %1069 = vmatprep.mubr.f32.mxu0 0.0
      %1070 = vmatmul.mubr.f32.gmra.mrb[0].mxu0 %v1002
      %v1071 = vpop.f32.mrb[0].mxu0
      %v1072 = vadd.f32 0.0, %v1071
      %v1073 = vpop.f32.mrb[0].mxu0
      %v1074 = vadd.f32 0.0, %v1073
      %1075 = vdwg.mxu0
      %1076 = vmatprep.subr.mxu0 %v556
      %1077 = vmatpush1.msra.mxu0 %v555
      %1078 = vmatprep.subr.mxu0 %v560
      %1079 = vmatpush1.msra.mxu0 %v559
      %1080 = vmatprep.subr.mxu0 %v564
      %1081 = vmatpush1.msra.mxu0 %v563
      %1082 = vmatprep.subr.mxu0 %v568
      %1083 = vmatpush1.msra.mxu0 %v567
      %1084 = vmatprep.subr.mxu0 %v572
      %1085 = vmatpush1.msra.mxu0 %v571
      %1086 = vmatprep.subr.mxu0 %v576
      %1087 = vmatpush1.msra.mxu0 %v575
      %1088 = vmatprep.subr.mxu0 %v580
      %1089 = vmatpush1.msra.mxu0 %v579
      %1090 = vmatprep.subr.mxu0 %v584
      %1091 = vmatpush1.msra.mxu0 %v583
      %1092 = vmatprep.subr.mxu0 %v588
      %1093 = vmatpush1.msra.mxu0 %v587
      %1094 = vmatprep.subr.mxu0 %v592
      %1095 = vmatpush1.msra.mxu0 %v591
      %1096 = vmatprep.subr.mxu0 %v596
      %1097 = vmatpush1.msra.mxu0 %v595
      %1098 = vmatprep.subr.mxu0 %v600
      %1099 = vmatpush1.msra.mxu0 %v599
      %1100 = vmatprep.subr.mxu0 %v604
      %1101 = vmatpush1.msra.mxu0 %v603
      %1102 = vmatprep.subr.mxu0 %v608
      %1103 = vmatpush1.msra.mxu0 %v607
      %1104 = vmatprep.subr.mxu0 %v612
      %1105 = vmatpush1.msra.mxu0 %v611
      %1106 = vmatprep.subr.mxu0 %v616
      %1107 = vmatpush1.msra.mxu0 %v615
      %1108 = vmatprep.subr.mxu0 0.0
      %1109 = vmatpush1.msra.mxu0 0.0
      %1110 = vmatprep.subr.mxu0 0.0
      %1111 = vmatpush1.msra.mxu0 0.0
      %1112 = vmatprep.subr.mxu0 0.0
      %1113 = vmatpush1.msra.mxu0 0.0
      %1114 = vmatprep.subr.mxu0 0.0
      %1115 = vmatpush1.msra.mxu0 0.0
      %1116 = vmatprep.subr.mxu0 0.0
      %1117 = vmatpush1.msra.mxu0 0.0
      %1118 = vmatprep.subr.mxu0 0.0
      %1119 = vmatpush1.msra.mxu0 0.0
      %1120 = vmatprep.subr.mxu0 0.0
      %1121 = vmatpush1.msra.mxu0 0.0
      %1122 = vmatprep.subr.mxu0 0.0
      %1123 = vmatpush1.msra.mxu0 0.0
      %1124 = vmatprep.subr.mxu0 0.0
      %1125 = vmatpush1.msra.mxu0 0.0
      %1126 = vmatprep.subr.mxu0 0.0
      %1127 = vmatpush1.msra.mxu0 0.0
      %1128 = vmatprep.subr.mxu0 0.0
      %1129 = vmatpush1.msra.mxu0 0.0
      %1130 = vmatprep.subr.mxu0 0.0
      %1131 = vmatpush1.msra.mxu0 0.0
      %1132 = vmatprep.subr.mxu0 0.0
      %1133 = vmatpush1.msra.mxu0 0.0
      %1134 = vmatprep.subr.mxu0 0.0
      %1135 = vmatpush1.msra.mxu0 0.0
      %1136 = vmatprep.subr.mxu0 0.0
      %1137 = vmatpush1.msra.mxu0 0.0
      %1138 = vmatprep.subr.mxu0 0.0
      %1139 = vmatpush1.msra.mxu0 0.0
      %1140 = vmatprep.mubr.f32.mxu0 0.0
      %1141 = vmatmul.mubr.f32.gmra.mrb[0].mxu0 %v1002
      %v1142 = vpop.f32.mrb[0].mxu0
      %v1143 = vadd.f32 0.0, %v1142
      %v1144 = vpop.f32.mrb[0].mxu0
      %v1145 = vadd.f32 0.0, %v1144
      %1146 = vdwg.mxu0
      %1147 = vmatprep.subr.mxu0 %v619
      %1148 = vmatpush1.msra.mxu0 %v618
      %1149 = vmatprep.subr.mxu0 %v623
      %1150 = vmatpush1.msra.mxu0 %v622
      %1151 = vmatprep.subr.mxu0 %v627
      %1152 = vmatpush1.msra.mxu0 %v626
      %1153 = vmatprep.subr.mxu0 %v631
      %1154 = vmatpush1.msra.mxu0 %v630
      %1155 = vmatprep.subr.mxu0 %v635
      %1156 = vmatpush1.msra.mxu0 %v634
      %1157 = vmatprep.subr.mxu0 %v639
      %1158 = vmatpush1.msra.mxu0 %v638
      %1159 = vmatprep.subr.mxu0 %v643
      %1160 = vmatpush1.msra.mxu0 %v642
      %1161 = vmatprep.subr.mxu0 %v647
      %1162 = vmatpush1.msra.mxu0 %v646
      %1163 = vmatprep.subr.mxu0 %v651
      %1164 = vmatpush1.msra.mxu0 %v650
      %1165 = vmatprep.subr.mxu0 %v655
      %1166 = vmatpush1.msra.mxu0 %v654
      %1167 = vmatprep.subr.mxu0 %v659
      %1168 = vmatpush1.msra.mxu0 %v658
      %1169 = vmatprep.subr.mxu0 %v663
      %1170 = vmatpush1.msra.mxu0 %v662
      %1171 = vmatprep.subr.mxu0 %v667
      %1172 = vmatpush1.msra.mxu0 %v666
      %1173 = vmatprep.subr.mxu0 %v671
      %1174 = vmatpush1.msra.mxu0 %v670
      %1175 = vmatprep.subr.mxu0 %v675
      %1176 = vmatpush1.msra.mxu0 %v674
      %1177 = vmatprep.subr.mxu0 %v679
      %1178 = vmatpush1.msra.mxu0 %v678
      %1179 = vmatprep.subr.mxu0 0.0
      %1180 = vmatpush1.msra.mxu0 0.0
      %1181 = vmatprep.subr.mxu0 0.0
      %1182 = vmatpush1.msra.mxu0 0.0
      %1183 = vmatprep.subr.mxu0 0.0
      %1184 = vmatpush1.msra.mxu0 0.0
      %1185 = vmatprep.subr.mxu0 0.0
      %1186 = vmatpush1.msra.mxu0 0.0
      %1187 = vmatprep.subr.mxu0 0.0
      %1188 = vmatpush1.msra.mxu0 0.0
      %1189 = vmatprep.subr.mxu0 0.0
      %1190 = vmatpush1.msra.mxu0 0.0
      %1191 = vmatprep.subr.mxu0 0.0
      %1192 = vmatpush1.msra.mxu0 0.0
      %1193 = vmatprep.subr.mxu0 0.0
      %1194 = vmatpush1.msra.mxu0 0.0
      %1195 = vmatprep.subr.mxu0 0.0
      %1196 = vmatpush1.msra.mxu0 0.0
      %1197 = vmatprep.subr.mxu0 0.0
      %1198 = vmatpush1.msra.mxu0 0.0
      %1199 = vmatprep.subr.mxu0 0.0
      %1200 = vmatpush1.msra.mxu0 0.0
      %1201 = vmatprep.subr.mxu0 0.0
      %1202 = vmatpush1.msra.mxu0 0.0
      %1203 = vmatprep.subr.mxu0 0.0
      %1204 = vmatpush1.msra.mxu0 0.0
      %1205 = vmatprep.subr.mxu0 0.0
      %1206 = vmatpush1.msra.mxu0 0.0
      %1207 = vmatprep.subr.mxu0 0.0
      %1208 = vmatpush1.msra.mxu0 0.0
      %1209 = vmatprep.subr.mxu0 0.0
      %1210 = vmatpush1.msra.mxu0 0.0
      %1211 = vmatprep.mubr.f32.mxu0 0.0
      %1212 = vmatmul.mubr.f32.gmra.mrb[0].mxu0 %v998
      %v1213 = vpop.f32.mrb[0].mxu0
      %v1214 = vadd.f32 %v1072, %v1213
      %v1215 = vpop.f32.mrb[0].mxu0
      %v1216 = vadd.f32 %v1074, %v1215
      %1217 = vdwg.mxu0
      %1218 = vmatprep.subr.mxu0 %v621
      %1219 = vmatpush1.msra.mxu0 %v620
      %1220 = vmatprep.subr.mxu0 %v625
      %1221 = vmatpush1.msra.mxu0 %v624
      %1222 = vmatprep.subr.mxu0 %v629
      %1223 = vmatpush1.msra.mxu0 %v628
      %1224 = vmatprep.subr.mxu0 %v633
      %1225 = vmatpush1.msra.mxu0 %v632
      %1226 = vmatprep.subr.mxu0 %v637
      %1227 = vmatpush1.msra.mxu0 %v636
      %1228 = vmatprep.subr.mxu0 %v641
      %1229 = vmatpush1.msra.mxu0 %v640
      %1230 = vmatprep.subr.mxu0 %v645
      %1231 = vmatpush1.msra.mxu0 %v644
      %1232 = vmatprep.subr.mxu0 %v649
      %1233 = vmatpush1.msra.mxu0 %v648
      %1234 = vmatprep.subr.mxu0 %v653
      %1235 = vmatpush1.msra.mxu0 %v652
      %1236 = vmatprep.subr.mxu0 %v657
      %1237 = vmatpush1.msra.mxu0 %v656
      %1238 = vmatprep.subr.mxu0 %v661
      %1239 = vmatpush1.msra.mxu0 %v660
      %1240 = vmatprep.subr.mxu0 %v665
      %1241 = vmatpush1.msra.mxu0 %v664
      %1242 = vmatprep.subr.mxu0 %v669
      %1243 = vmatpush1.msra.mxu0 %v668
      %1244 = vmatprep.subr.mxu0 %v673
      %1245 = vmatpush1.msra.mxu0 %v672
      %1246 = vmatprep.subr.mxu0 %v677
      %1247 = vmatpush1.msra.mxu0 %v676
      %1248 = vmatprep.subr.mxu0 %v681
      %1249 = vmatpush1.msra.mxu0 %v680
      %1250 = vmatprep.subr.mxu0 0.0
      %1251 = vmatpush1.msra.mxu0 0.0
      %1252 = vmatprep.subr.mxu0 0.0
      %1253 = vmatpush1.msra.mxu0 0.0
      %1254 = vmatprep.subr.mxu0 0.0
      %1255 = vmatpush1.msra.mxu0 0.0
      %1256 = vmatprep.subr.mxu0 0.0
      %1257 = vmatpush1.msra.mxu0 0.0
      %1258 = vmatprep.subr.mxu0 0.0
      %1259 = vmatpush1.msra.mxu0 0.0
      %1260 = vmatprep.subr.mxu0 0.0
      %1261 = vmatpush1.msra.mxu0 0.0
      %1262 = vmatprep.subr.mxu0 0.0
      %1263 = vmatpush1.msra.mxu0 0.0
      %1264 = vmatprep.subr.mxu0 0.0
      %1265 = vmatpush1.msra.mxu0 0.0
      %1266 = vmatprep.subr.mxu0 0.0
      %1267 = vmatpush1.msra.mxu0 0.0
      %1268 = vmatprep.subr.mxu0 0.0
      %1269 = vmatpush1.msra.mxu0 0.0
      %1270 = vmatprep.subr.mxu0 0.0
      %1271 = vmatpush1.msra.mxu0 0.0
      %1272 = vmatprep.subr.mxu0 0.0
      %1273 = vmatpush1.msra.mxu0 0.0
      %1274 = vmatprep.subr.mxu0 0.0
      %1275 = vmatpush1.msra.mxu0 0.0
      %1276 = vmatprep.subr.mxu0 0.0
      %1277 = vmatpush1.msra.mxu0 0.0
      %1278 = vmatprep.subr.mxu0 0.0
      %1279 = vmatpush1.msra.mxu0 0.0
      %1280 = vmatprep.subr.mxu0 0.0
      %1281 = vmatpush1.msra.mxu0 0.0
      %1282 = vmatprep.mubr.f32.mxu0 0.0
      %1283 = vmatmul.mubr.f32.gmra.mrb[0].mxu0 %v998
      %v1284 = vpop.f32.mrb[0].mxu0
      %v1285 = vadd.f32 %v1143, %v1284
      %v1286 = vpop.f32.mrb[0].mxu0
      %v1287 = vadd.f32 %v1145, %v1286
      %1288 = vdwg.mxu0
      %v1290 = vlaneseq
      %v1291 = vshrl.u32 %v1290, 7
      %v1292 = vsub.s32 0, %v1291
      %v1293 = vrot.slane %v683, %v1292
      %v1294 = vlaneseq
      %v1295 = vshrl.u32 %v1294, 7
      %v1296 = vsub.s32 1, %v1295
      %v1297 = vrot.slane %v683, %v1296
      %v1298 = vlaneseq
      %v1299 = vshrl.u32 %v1298, 7
      %v1300 = vsub.s32 2, %v1299
      %v1301 = vrot.slane %v683, %v1300
      %v1302 = vlaneseq
      %v1303 = vshrl.u32 %v1302, 7
      %v1304 = vsub.s32 3, %v1303
      %v1305 = vrot.slane %v683, %v1304
      %v1310 = vadd.f32 %v1214, %v1293
      %v1311 = vadd.f32 %v1216, %v1297
      %v1312 = vadd.f32 %v1285, %v1301
      %v1313 = vadd.f32 %v1287, %v1305
      %v1314 = vxor.u32 %v1310, 2147483648
      %v1315 = vmul.f32 %v1314, 1.442695
      %v1316 = vpow.pop %v1315
      %v1317 = vadd.f32 %v1316, 1.0
      %v1318 = vrcp.pop %v1317
      %v1319 = vmul.f32 1.0, %v1318
      %v1320 = vxor.u32 %v1311, 2147483648
      %v1321 = vmul.f32 %v1320, 1.442695
      %v1322 = vpow.pop %v1321
      %v1323 = vadd.f32 %v1322, 1.0
      %v1324 = vrcp.pop %v1323
      %v1325 = vmul.f32 1.0, %v1324
      %v1326 = vtanh.pop %v1312
      %v1327 = vxor.u32 %v1313, 2147483648
      %v1328 = vmul.f32 %v1327, 1.442695
      %v1329 = vpow.pop %v1328
      %v1330 = vadd.f32 %v1329, 1.0
      %v1331 = vrcp.pop %v1330
      %v1332 = vmul.f32 1.0, %v1331
      %v1333 = vmul.f32 %v1325, %v1004
      %v1334 = vmul.f32 %v1319, %v1326
      %v1335 = vadd.f32 %v1333, %v1334
      %v1336 = vtanh.pop %v1335
      %v1337 = vmul.f32 %v1332, %v1336
      %1338 = vst [vmem:[%s1001] sm:$0xff] %v1337
      %1339 = vst [vmem:[%s1003] sm:$0xff] %v1335
      %1340 = vst [vmem:[#allocation2] sm:$0xff] %v1337
    $region89: #{tpu_custom_call.1} parent=1 // pred_fallthru
      _
    %v1341 = vld [vmem:[#allocation18] sm:$0xff]
    %v1342 = vld [vmem:[#allocation18 + $0x8] sm:$0xff]
    %v1343 = vld [vmem:[#allocation18 + $0x10] sm:$0xff]
    %v1344 = vld [vmem:[#allocation18 + $0x18] sm:$0xff]
    %v1345 = vld [vmem:[#allocation18 + $0x20] sm:$0xff]
    %v1346 = vld [vmem:[#allocation18 + $0x28] sm:$0xff]
    %v1347 = vld [vmem:[#allocation18 + $0x30] sm:$0xff]
    %v1348 = vld [vmem:[#allocation18 + $0x38] sm:$0xff]
    %v1349 = vld [vmem:[#allocation18 + $0x40] sm:$0xff]
    %v1350 = vld [vmem:[#allocation18 + $0x48] sm:$0xff]
    %v1351 = vld [vmem:[#allocation18 + $0x50] sm:$0xff]
    %v1352 = vld [vmem:[#allocation18 + $0x58] sm:$0xff]
    %v1353 = vld [vmem:[#allocation18 + $0x60] sm:$0xff]
    %v1354 = vld [vmem:[#allocation18 + $0x68] sm:$0xff]
    %v1355 = vld [vmem:[#allocation18 + $0x70] sm:$0xff]
    %v1356 = vld [vmem:[#allocation18 + $0x78] sm:$0xff]
    %v1357 = vld [vmem:[#allocation18 + $0x80] sm:$0xff]
    %v1358 = vld [vmem:[#allocation18 + $0x88] sm:$0xff]
    %v1359 = vld [vmem:[#allocation18 + $0x90] sm:$0xff]
    %v1360 = vld [vmem:[#allocation18 + $0x98] sm:$0xff]
    %v1361 = vld [vmem:[#allocation18 + $0xa0] sm:$0xff]
    %v1362 = vld [vmem:[#allocation18 + $0xa8] sm:$0xff]
    %v1363 = vld [vmem:[#allocation18 + $0xb0] sm:$0xff]
    %v1364 = vld [vmem:[#allocation18 + $0xb8] sm:$0xff]
    %v1365 = vld [vmem:[#allocation18 + $0xc0] sm:$0xff]
    %v1366 = vld [vmem:[#allocation18 + $0xc8] sm:$0xff]
    %v1367 = vld [vmem:[#allocation18 + $0xd0] sm:$0xff]
    %v1368 = vld [vmem:[#allocation18 + $0xd8] sm:$0xff]
    %v1369 = vld [vmem:[#allocation18 + $0xe0] sm:$0xff]
    %v1370 = vld [vmem:[#allocation18 + $0xe8] sm:$0xff]
    %v1371 = vld [vmem:[#allocation18 + $0xf0] sm:$0xff]
    %v1372 = vld [vmem:[#allocation18 + $0xf8] sm:$0xff]
    %v1373 = vld [vmem:[#allocation2] sm:$0xff]
    %v1374 = vld [vmem:[#allocation19] sm:$0x3]
    %v1376 = vlaneseq
    %v1377 = vshrl.u32 %v1376, 7
    %v1378 = vsub.s32 0, %v1377
    %v1379 = vrot.slane %v1374, %v1378
    %v1380 = vlaneseq
    %v1381 = vshrl.u32 %v1380, 7
    %v1382 = vsub.s32 1, %v1381
    %v1383 = vrot.slane %v1374, %v1382
    %1386 = vmatprep.subr.mxu0 %v1342
    %1387 = vmatpush1.msra.mxu0 %v1341
    %1388 = vmatprep.subr.mxu0 %v1344
    %1389 = vmatpush1.msra.mxu0 %v1343
    %1390 = vmatprep.subr.mxu0 %v1346
    %1391 = vmatpush1.msra.mxu0 %v1345
    %1392 = vmatprep.subr.mxu0 %v1348
    %1393 = vmatpush1.msra.mxu0 %v1347
    %1394 = vmatprep.subr.mxu0 %v1350
    %1395 = vmatpush1.msra.mxu0 %v1349
    %1396 = vmatprep.subr.mxu0 %v1352
    %1397 = vmatpush1.msra.mxu0 %v1351
    %1398 = vmatprep.subr.mxu0 %v1354
    %1399 = vmatpush1.msra.mxu0 %v1353
    %1400 = vmatprep.subr.mxu0 %v1356
    %1401 = vmatpush1.msra.mxu0 %v1355
    %1402 = vmatprep.subr.mxu0 %v1358
    %1403 = vmatpush1.msra.mxu0 %v1357
    %1404 = vmatprep.subr.mxu0 %v1360
    %1405 = vmatpush1.msra.mxu0 %v1359
    %1406 = vmatprep.subr.mxu0 %v1362
    %1407 = vmatpush1.msra.mxu0 %v1361
    %1408 = vmatprep.subr.mxu0 %v1364
    %1409 = vmatpush1.msra.mxu0 %v1363
    %1410 = vmatprep.subr.mxu0 %v1366
    %1411 = vmatpush1.msra.mxu0 %v1365
    %1412 = vmatprep.subr.mxu0 %v1368
    %1413 = vmatpush1.msra.mxu0 %v1367
    %1414 = vmatprep.subr.mxu0 %v1370
    %1415 = vmatpush1.msra.mxu0 %v1369
    %1416 = vmatprep.subr.mxu0 %v1372
    %1417 = vmatpush1.msra.mxu0 %v1371
    %1418 = vmatprep.subr.mxu0 0.0
    %1419 = vmatpush1.msra.mxu0 0.0
    %1420 = vmatprep.subr.mxu0 0.0
    %1421 = vmatpush1.msra.mxu0 0.0
    %1422 = vmatprep.subr.mxu0 0.0
    %1423 = vmatpush1.msra.mxu0 0.0
    %1424 = vmatprep.subr.mxu0 0.0
    %1425 = vmatpush1.msra.mxu0 0.0
    %1426 = vmatprep.subr.mxu0 0.0
    %1427 = vmatpush1.msra.mxu0 0.0
    %1428 = vmatprep.subr.mxu0 0.0
    %1429 = vmatpush1.msra.mxu0 0.0
    %1430 = vmatprep.subr.mxu0 0.0
    %1431 = vmatpush1.msra.mxu0 0.0
    %1432 = vmatprep.subr.mxu0 0.0
    %1433 = vmatpush1.msra.mxu0 0.0
    %1434 = vmatprep.subr.mxu0 0.0
    %1435 = vmatpush1.msra.mxu0 0.0
    %1436 = vmatprep.subr.mxu0 0.0
    %1437 = vmatpush1.msra.mxu0 0.0
    %1438 = vmatprep.subr.mxu0 0.0
    %1439 = vmatpush1.msra.mxu0 0.0
    %1440 = vmatprep.subr.mxu0 0.0
    %1441 = vmatpush1.msra.mxu0 0.0
    %1442 = vmatprep.subr.mxu0 0.0
    %1443 = vmatpush1.msra.mxu0 0.0
    %1444 = vmatprep.subr.mxu0 0.0
    %1445 = vmatpush1.msra.mxu0 0.0
    %1446 = vmatprep.subr.mxu0 0.0
    %1447 = vmatpush1.msra.mxu0 0.0
    %1448 = vmatprep.subr.mxu0 0.0
    %1449 = vmatpush1.msra.mxu0 0.0
    %1450 = vmatprep.mubr.f32.mxu0 0.0
    %1451 = vmatmul.mubr.f32.gmra.mrb[0].mxu0 %v1373
    %v1452 = vpop.f32.mrb[0].mxu0
    %v1453 = vadd.f32 %v1379, %v1452
    %v1454 = vpop.f32.mrb[0].mxu0
    %v1455 = vadd.f32 %v1383, %v1454
    %1456 = vdwg.mxu0
    %1457 = vst [vmem:[#allocation21] sm:$0xff] %v1453
    %1458 = vst [vmem:[#allocation21 + $0x8] sm:$0xff] %v1455
    // Predicated region
    $region90: #{tpu_custom_call.1} parent=1 // pred_check
      _
    $region91: #{tpu_custom_call.1} parent=1 // pred_check_branch
      %1460 = sbr.rel (0) target = $region93
    $region92: #{tpu_custom_call.1} parent=1 // pred_region
      %s1462 = ssub.s32 256, 256
      %1463 = vsyncadd [#allocation6], %s1462
      %s1465 = sshll.u32 [#allocation21], 4
      %s1466 = int_to_ptr.vmem [resolvable:$true] %s1465
      %1468 = dma.vmem_to_hbm [thread:$0]  %s1466, 256, %s10, [#allocation6]
    $region93: #{tpu_custom_call.1} parent=1 // pred_fallthru
      _
    // Predicated region
    $region94: #{tpu_custom_call.1} parent=1 // pred_check
      _
    $region95: #{tpu_custom_call.1} parent=1 // pred_check_branch
      %1470 = sbr.rel (0) target = $region97
    $region96: #{tpu_custom_call.1} parent=1 // pred_region
      %s1472 = ssub.s32 256, 256
      %1473 = vsyncadd [#allocation23], %s1472
      %s1474 = sshll.u32 [#allocation22], 4
      %s1475 = int_to_ptr.vmem [resolvable:$true] %s1474
      %1480 = dma.vmem_to_hbm [thread:$0]  %s1475, 256, %s11, [#allocation23], 128, 128, 8
    $region97: #{tpu_custom_call.1} parent=1 // pred_fallthru
      _
    // Predicated region
    $region98: #{tpu_custom_call.1} parent=1 // pred_check
      _
    $region99: #{tpu_custom_call.1} parent=1 // pred_check_branch
      %1482 = sbr.rel (0) target = $region101
    $region100: #{tpu_custom_call.1} parent=1 // pred_region
      %s1484 = ssub.s32 256, 256
      %1485 = vsyncadd [#allocation23], %s1484
      %s1486 = sshll.u32 [#allocation24], 4
      %s1487 = int_to_ptr.vmem [resolvable:$true] %s1486
      %1492 = dma.vmem_to_hbm [thread:$0]  %s1487, 256, %s12, [#allocation23], 128, 128, 8
    $region101: #{tpu_custom_call.1} parent=1 // pred_fallthru
      _
    // Predicated region
    $region102: #{tpu_custom_call.1} parent=1 // pred_check
      _
    $region103: #{tpu_custom_call.1} parent=1 // pred_check_branch
      %1494 = sbr.rel (0) target = $region105
    $region104: #{tpu_custom_call.1} parent=1 // pred_region
      %1495 = dma.done [#allocation6], 256
    $region105: #{tpu_custom_call.1} parent=1 // pred_fallthru
      _
    // Predicated region
    $region106: #{tpu_custom_call.1} parent=1 // pred_check
      _
    $region107: #{tpu_custom_call.1} parent=1 // pred_check_branch
      %1497 = sbr.rel (0) target = $region109
    $region108: #{tpu_custom_call.1} parent=1 // pred_region
      %1498 = dma.done [#allocation23], 256
    $region109: #{tpu_custom_call.1} parent=1 // pred_fallthru
      _
    // Predicated region
    $region110: #{tpu_custom_call.1} parent=1 // pred_check
      _
    $region111: #{tpu_custom_call.1} parent=1 // pred_check_branch
      %1500 = sbr.rel (0) target = $region113
    $region112: #{tpu_custom_call.1} parent=1 // pred_region
      %1501 = dma.done [#allocation23], 256
    $region113: #{tpu_custom_call.1} parent=1 // pred_fallthru
      _
    %1502 = vsyncpa [#allocation5], 1
    %1503 = vsyncpa [#allocation8], 1
    %1504 = vsyncpa [#allocation11], 1
    %1505 = vsyncpa [#allocation14], 1
    %1506 = vsyncpa [#allocation17], 1
    %1507 = vsyncpa [#allocation20], 1
    %1508 = vsyncpa [#allocation6], 1
    %1509 = vsyncpa [#allocation23], 1

</llo_original>
